<compile_context>
chip_gen: v7x
topology: tpu7x:2x2x1
jax: 0.10.0
libtpu: 0.0.40
codegen_flags: <defaults>
</compile_context>

<pallas_src>
import functools

import jax
import jax.numpy as jnp
from jax.experimental import pallas as pl
from jax.experimental.pallas import tpu as pltpu

_EPS = 1e-5
_VMEM_LIMIT = 48 * 1024 * 1024   # > 16/32 MiB scoped defaults, < v7x 64 MiB phys


# ---------------------------------------------------------------------------
# Conv kernel: 3x3 / stride 1 / pad 1 as a single fused im2col matmul (K=9*Cp)
# plus per-tile BatchNorm partial statistics.  Optionally fuses the previous
# layer's BN (as per-channel scale/bias) + ReLU into the input stage.
# ---------------------------------------------------------------------------
def _conv3x3_kernel(xp_ref, w_ref, scale_ref, bias_ref, y_ref, stat_ref,
                    col_ref, *, apply_act: bool):
    # xp_ref : (1, H+2, W+2, Cp) spatially padded input tile
    # w_ref  : (9*Cp, Cp)        fused conv taps, K index = (dh*3+dw)*Cp + ci
    # scale_ref, bias_ref: (1, Cp) folded BN scale/bias applied to the *input*
    # y_ref  : (1, H, W, Cp)     pre-BN conv output (f32)
    # stat_ref: (1, 2, Cp)       per-tile [sum, sum-of-squares] per channel
    # col_ref: (H*W, 9*Cp) bf16  VMEM scratch: im2col slab (staged once)
    _, Hp, Wp, Cp = xp_ref.shape
    H, W = Hp - 2, Wp - 2
    HW = H * W

    xw = xp_ref[0].astype(jnp.float32)                         # (Hp, Wp, Cp)
    if apply_act:
        # Fused BN(prev)+ReLU on the padded tile, then re-zero the halo
        # (zero padding must be applied *after* the activation).
        xw = (xw * scale_ref[...].reshape(1, 1, Cp)
              + bias_ref[...].reshape(1, 1, Cp))
        xw = jnp.maximum(xw, 0.0)
        row = jax.lax.broadcasted_iota(jnp.int32, (Hp, Wp, Cp), 0)
        col = jax.lax.broadcasted_iota(jnp.int32, (Hp, Wp, Cp), 1)
        interior = (row >= 1) & (row <= H) & (col >= 1) & (col <= W)
        xw = jnp.where(interior, xw, 0.0)

    # Stage the nine shifted taps once into the bf16 im2col slab.
    for dh in range(3):
        for dw in range(3):
            t = dh * 3 + dw
            col_ref[:, t * Cp:(t + 1) * Cp] = (
                xw[dh:dh + H, dw:dw + W, :].reshape(HW, Cp)
                .astype(jnp.bfloat16))

    # One MXU contraction: (HW, 9*Cp) x (9*Cp, Cp), f32 accumulation.
    acc = jnp.dot(col_ref[...], w_ref[...], preferred_element_type=jnp.float32)

    # One-pass BN partial statistics, kept in f32.
    s = jnp.sum(acc, axis=0, keepdims=True)                    # (1, Cp)
    sq = jnp.sum(acc * acc, axis=0, keepdims=True)             # (1, Cp)
    stat_ref[...] = jnp.concatenate([s, sq], axis=0).reshape(1, 2, Cp)

    y_ref[...] = acc.reshape(1, H, W, Cp).astype(y_ref.dtype)


def _conv_stage(xp, w, scale, bias, *, apply_act):
    # TODO(synk): for very large H*W additionally tile over H-row blocks with a
    # 1-row halo so the per-step im2col slab stays within the VMEM budget.
    N, Hp, Wp, Cp = xp.shape
    H, W = Hp - 2, Wp - 2
    kernel = functools.partial(_conv3x3_kernel, apply_act=apply_act)
    return pl.pallas_call(
        kernel,
        out_shape=(jax.ShapeDtypeStruct((N, H, W, Cp), jnp.float32),
                   jax.ShapeDtypeStruct((N, 2, Cp), jnp.float32)),
        grid=(N,),
        in_specs=[
            pl.BlockSpec((1, Hp, Wp, Cp), lambda n: (n, 0, 0, 0)),
            pl.BlockSpec((9 * Cp, Cp), lambda n: (0, 0)),   # VMEM-resident
            pl.BlockSpec((1, Cp), lambda n: (0, 0)),        # VMEM-resident
            pl.BlockSpec((1, Cp), lambda n: (0, 0)),        # VMEM-resident
        ],
        out_specs=(
            pl.BlockSpec((1, H, W, Cp), lambda n: (n, 0, 0, 0)),
            pl.BlockSpec((1, 2, Cp), lambda n: (n, 0, 0)),
        ),
        scratch_shapes=[pltpu.VMEM((H * W, 9 * Cp), jnp.bfloat16)],
        compiler_params=pltpu.CompilerParams(
            dimension_semantics=("parallel",),
            vmem_limit_bytes=_VMEM_LIMIT),
    )(xp, w, scale, bias)


# ---------------------------------------------------------------------------
# Finalize kernel: BN2 (folded scale/bias) + ReLU + residual add, lane-dense.
# ---------------------------------------------------------------------------
def _bn_relu_residual_kernel(y_ref, scale_ref, bias_ref, idn_ref, out_ref):
    _, H, W, Cp = y_ref.shape
    s = scale_ref[...].reshape(1, 1, 1, Cp)
    b = bias_ref[...].reshape(1, 1, 1, Cp)
    act = jnp.maximum(y_ref[...] * s + b, 0.0)
    out_ref[...] = (act + idn_ref[...]).astype(out_ref.dtype)


def _finalize_stage(y, scale, bias, identity):
    N, H, W, Cp = y.shape
    return pl.pallas_call(
        _bn_relu_residual_kernel,
        out_shape=jax.ShapeDtypeStruct((N, H, W, Cp), jnp.float32),
        grid=(N,),
        in_specs=[
            pl.BlockSpec((1, H, W, Cp), lambda n: (n, 0, 0, 0)),
            pl.BlockSpec((1, Cp), lambda n: (0, 0)),
            pl.BlockSpec((1, Cp), lambda n: (0, 0)),
            pl.BlockSpec((1, H, W, Cp), lambda n: (n, 0, 0, 0)),
        ],
        out_specs=pl.BlockSpec((1, H, W, Cp), lambda n: (n, 0, 0, 0)),
        compiler_params=pltpu.CompilerParams(
            dimension_semantics=("parallel",),
            vmem_limit_bytes=_VMEM_LIMIT),
    )(y, scale, bias, identity)


# ---------------------------------------------------------------------------
# Per-channel fold: partial (sum, sumsq) -> BN train-mode scale / bias.
# ---------------------------------------------------------------------------
def _fold_bn(stats, gamma, beta, count):
    s = jnp.sum(stats, axis=0)                       # (2, Cp), f32
    mean = s[0] / count
    var = s[1] / count - mean * mean                 # biased (PyTorch train norm)
    scale = gamma[0] * jax.lax.rsqrt(var + _EPS)
    bias = beta[0] - mean * scale
    cp = mean.shape[0]
    return scale.reshape(1, cp), bias.reshape(1, cp)


# ---------------------------------------------------------------------------
# Wrapper: PyTorch-style NCHW in/out.
# ---------------------------------------------------------------------------
def basic_block_forward(x_nchw, w1_oihw, w2_oihw, g1, b1, g2, b2):
    N, C, H, W = x_nchw.shape
    Cout = w1_oihw.shape[0]
    assert C == Cout, "stride=1 / downsample=None config requires Cin == Cout"
    # TODO(synk): stride>1 + downsample branch of BasicBlock not implemented
    # (downsample is None in this configuration).

    Cp = ((C + 127) // 128) * 128        # lane-dense channel padding
    count = N * H * W

    # NCHW -> NHWC, pad channels to Cp (padded gamma/beta/weights are zero, so
    # padded channels stay exactly zero through the whole block).
    x_nhwc = jnp.transpose(x_nchw, (0, 2, 3, 1)).astype(jnp.float32)
    x_cp = jnp.pad(x_nhwc, ((0, 0), (0, 0), (0, 0), (0, Cp - C)))
    xp1 = jnp.pad(x_cp, ((0, 0), (1, 1), (1, 1), (0, 0))).astype(jnp.bfloat16)

    def pack_weight(w_oihw):
        # (O, I, 3, 3) -> (kh, kw, I, O) -> channel-pad -> (9*Cp, Cp) bf16
        w = jnp.transpose(w_oihw, (2, 3, 1, 0)).astype(jnp.float32)
        w = jnp.pad(w, ((0, 0), (0, 0), (0, Cp - C), (0, Cp - Cout)))
        return w.reshape(9 * Cp, Cp).astype(jnp.bfloat16)

    w1 = pack_weight(w1_oihw)
    w2 = pack_weight(w2_oihw)

    def pad_vec(v):
        return jnp.pad(v.astype(jnp.float32), (0, Cp - C)).reshape(1, Cp)

    g1p, b1p, g2p, b2p = (pad_vec(v) for v in (g1, b1, g2, b2))
    ones = jnp.ones((1, Cp), jnp.float32)
    zeros = jnp.zeros((1, Cp), jnp.float32)

    # stage 1: conv1 + per-tile BN1 partial stats
    y1, st1 = _conv_stage(xp1, w1, ones, zeros, apply_act=False)
    s1, t1 = _fold_bn(st1, g1p, b1p, count)

    # stage 2: fused bn1+relu (per-channel scale/bias) -> conv2 + BN2 stats
    y1p = jnp.pad(y1, ((0, 0), (1, 1), (1, 1), (0, 0)))
    y2, st2 = _conv_stage(y1p, w2, s1, t1, apply_act=True)
    s2, t2 = _fold_bn(st2, g2p, b2p, count)

    # stage 3: bn2 + relu + residual add
    out = _finalize_stage(y2, s2, t2, x_cp)

    out = out[..., :C]                               # drop channel padding
    return jnp.transpose(out, (0, 3, 1, 2)).astype(x_nchw.dtype)


# ---------------------------------------------------------------------------
# Pure-JAX reference (NCHW, f32), mirrors the PyTorch forward in train mode.
# ---------------------------------------------------------------------------
def reference_basic_block(x, w1, w2, g1, b1, g2, b2):
    def conv(x, w):
        return jax.lax.conv_general_dilated(
            x, w, window_strides=(1, 1), padding=((1, 1), (1, 1)),
            dimension_numbers=('NCHW', 'OIHW', 'NCHW'))

    def bn_train(x, g, b):
        mean = jnp.mean(x, axis=(0, 2, 3), keepdims=True)
        var = jnp.mean(jnp.square(x - mean), axis=(0, 2, 3), keepdims=True)
        xhat = (x - mean) / jnp.sqrt(var + _EPS)
        return xhat * g[None, :, None, None] + b[None, :, None, None]

    out = jnp.maximum(bn_train(conv(x, w1), g1, b1), 0.0)
    out = jnp.maximum(bn_train(conv(out, w2), g2, b2), 0.0)
    return out + x


if __name__ == "__main__":
    key = jax.random.PRNGKey(0)
    N, C, H, W = 2, 8, 16, 16   # small shapes; inpChannels == outChannels
    k_x, k_w1, k_w2, k_g1, k_b1, k_g2, k_b2 = jax.random.split(key, 7)

    x = jax.random.normal(k_x, (N, C, H, W), jnp.float32)
    w1 = jax.random.normal(k_w1, (C, C, 3, 3), jnp.float32) * 0.1
    w2 = jax.random.normal(k_w2, (C, C, 3, 3), jnp.float32) * 0.1
    g1 = 1.0 + 0.1 * jax.random.normal(k_g1, (C,), jnp.float32)
    b1 = 0.1 * jax.random.normal(k_b1, (C,), jnp.float32)
    g2 = 1.0 + 0.1 * jax.random.normal(k_g2, (C,), jnp.float32)
    b2 = 0.1 * jax.random.normal(k_b2, (C,), jnp.float32)

    out = basic_block_forward(x, w1, w2, g1, b1, g2, b2)
    out = jax.block_until_ready(out)

    ref = reference_basic_block(x, w1, w2, g1, b1, g2, b2)
    ref = jax.block_until_ready(ref)

    assert out.shape == (N, C, H, W)
    # bf16 MXU operands (f32 accumulation) across two convs + two BN
    # normalisations -> looser tolerance than the pure-f32 reference.
    max_err = float(jnp.max(jnp.abs(out - ref)))
    assert jnp.allclose(out, ref, atol=5e-2, rtol=5e-2), (
        f"max abs err {max_err}")
    print("KERNEL_OK")
</pallas_src>

<mosaic_0001>
module attributes {stable_mosaic.version = 11 : i64} {
  func.func @_conv3x3_kernel(%arg0: i32, %arg1: memref<1x18x18x128xbf16, #tpu.memory_space<vmem>>, %arg2: memref<1152x128xbf16, #tpu.memory_space<vmem>>, %arg3: memref<1x128xf32, #tpu.memory_space<vmem>>, %arg4: memref<1x128xf32, #tpu.memory_space<vmem>>, %arg5: memref<1x16x16x128xf32, #tpu.memory_space<vmem>>, %arg6: memref<1x2x128xf32, #tpu.memory_space<vmem>>, %arg7: memref<256x1152xbf16, #tpu.memory_space<vmem>>) attributes {dimension_semantics = [#tpu.dimension_semantics<parallel>], iteration_bounds = array<i64: 2>, scalar_prefetch = 0 : i64, scratch_operands = 1 : i64, tpu.core_type = #tpu.core_type<tc>, window_params = [{transform_indices = @transform_0, window_bounds = array<i64: 1, 18, 18, 128>}, {pipeline_mode = #tpu.pipeline_mode<synchronous>, transform_indices = @transform_1, window_bounds = array<i64: 1152, 128>}, {pipeline_mode = #tpu.pipeline_mode<synchronous>, transform_indices = @transform_2, window_bounds = array<i64: 1, 128>}, {pipeline_mode = #tpu.pipeline_mode<synchronous>, transform_indices = @transform_3, window_bounds = array<i64: 1, 128>}, {transform_indices = @transform_4, window_bounds = array<i64: 1, 16, 16, 128>}, {transform_indices = @transform_5, window_bounds = array<i64: 1, 2, 128>}]} {
    %c0 = arith.constant 0 : index
    %c0_0 = arith.constant 0 : index
    %c0_1 = arith.constant 0 : index
    %c0_2 = arith.constant 0 : index
    %0 = vector.load %arg1[%c0, %c0_0, %c0_1, %c0_2] : memref<1x18x18x128xbf16, #tpu.memory_space<vmem>>, vector<1x18x18x128xbf16>
    %1 = vector.shape_cast %0 : vector<1x18x18x128xbf16> to vector<18x18x128xbf16>
    %2 = arith.extf %1 : vector<18x18x128xbf16> to vector<18x18x128xf32>
    %3 = vector.extract_strided_slice %2 {offsets = [0, 0, 0], sizes = [16, 16, 128], strides = [1, 1, 1]} : vector<18x18x128xf32> to vector<16x16x128xf32>
    %4 = vector.shape_cast %3 : vector<16x16x128xf32> to vector<256x128xf32>
    %5 = arith.truncf %4 : vector<256x128xf32> to vector<256x128xbf16>
    %c0_3 = arith.constant 0 : index
    %c0_4 = arith.constant 0 : index
    %6 = vector.load %arg7[%c0_3, %c0_4] : memref<256x1152xbf16, #tpu.memory_space<vmem>>, vector<256x128xbf16>
    tpu.vector_store %arg7[%c0_3, %c0_4], %5 {strides = array<i32>} : memref<256x1152xbf16, #tpu.memory_space<vmem>>, vector<256x128xbf16>,
    %7 = vector.extract_strided_slice %2 {offsets = [0, 1, 0], sizes = [16, 16, 128], strides = [1, 1, 1]} : vector<18x18x128xf32> to vector<16x16x128xf32>
    %8 = vector.shape_cast %7 : vector<16x16x128xf32> to vector<256x128xf32>
    %9 = arith.truncf %8 : vector<256x128xf32> to vector<256x128xbf16>
    %c0_5 = arith.constant 0 : index
    %c128 = arith.constant 128 : index
    %10 = vector.load %arg7[%c0_5, %c128] : memref<256x1152xbf16, #tpu.memory_space<vmem>>, vector<256x128xbf16>
    tpu.vector_store %arg7[%c0_5, %c128], %9 {strides = array<i32>} : memref<256x1152xbf16, #tpu.memory_space<vmem>>, vector<256x128xbf16>,
    %11 = vector.extract_strided_slice %2 {offsets = [0, 2, 0], sizes = [16, 16, 128], strides = [1, 1, 1]} : vector<18x18x128xf32> to vector<16x16x128xf32>
    %12 = vector.shape_cast %11 : vector<16x16x128xf32> to vector<256x128xf32>
    %13 = arith.truncf %12 : vector<256x128xf32> to vector<256x128xbf16>
    %c0_6 = arith.constant 0 : index
    %c256 = arith.constant 256 : index
    %14 = vector.load %arg7[%c0_6, %c256] : memref<256x1152xbf16, #tpu.memory_space<vmem>>, vector<256x128xbf16>
    tpu.vector_store %arg7[%c0_6, %c256], %13 {strides = array<i32>} : memref<256x1152xbf16, #tpu.memory_space<vmem>>, vector<256x128xbf16>,
    %15 = vector.extract_strided_slice %2 {offsets = [1, 0, 0], sizes = [16, 16, 128], strides = [1, 1, 1]} : vector<18x18x128xf32> to vector<16x16x128xf32>
    %16 = vector.shape_cast %15 : vector<16x16x128xf32> to vector<256x128xf32>
    %17 = arith.truncf %16 : vector<256x128xf32> to vector<256x128xbf16>
    %c0_7 = arith.constant 0 : index
    %c384 = arith.constant 384 : index
    %18 = vector.load %arg7[%c0_7, %c384] : memref<256x1152xbf16, #tpu.memory_space<vmem>>, vector<256x128xbf16>
    tpu.vector_store %arg7[%c0_7, %c384], %17 {strides = array<i32>} : memref<256x1152xbf16, #tpu.memory_space<vmem>>, vector<256x128xbf16>,
    %19 = vector.extract_strided_slice %2 {offsets = [1, 1, 0], sizes = [16, 16, 128], strides = [1, 1, 1]} : vector<18x18x128xf32> to vector<16x16x128xf32>
    %20 = vector.shape_cast %19 : vector<16x16x128xf32> to vector<256x128xf32>
    %21 = arith.truncf %20 : vector<256x128xf32> to vector<256x128xbf16>
    %c0_8 = arith.constant 0 : index
    %c512 = arith.constant 512 : index
    %22 = vector.load %arg7[%c0_8, %c512] : memref<256x1152xbf16, #tpu.memory_space<vmem>>, vector<256x128xbf16>
    tpu.vector_store %arg7[%c0_8, %c512], %21 {strides = array<i32>} : memref<256x1152xbf16, #tpu.memory_space<vmem>>, vector<256x128xbf16>,
    %23 = vector.extract_strided_slice %2 {offsets = [1, 2, 0], sizes = [16, 16, 128], strides = [1, 1, 1]} : vector<18x18x128xf32> to vector<16x16x128xf32>
    %24 = vector.shape_cast %23 : vector<16x16x128xf32> to vector<256x128xf32>
    %25 = arith.truncf %24 : vector<256x128xf32> to vector<256x128xbf16>
    %c0_9 = arith.constant 0 : index
    %c640 = arith.constant 640 : index
    %26 = vector.load %arg7[%c0_9, %c640] : memref<256x1152xbf16, #tpu.memory_space<vmem>>, vector<256x128xbf16>
    tpu.vector_store %arg7[%c0_9, %c640], %25 {strides = array<i32>} : memref<256x1152xbf16, #tpu.memory_space<vmem>>, vector<256x128xbf16>,
    %27 = vector.extract_strided_slice %2 {offsets = [2, 0, 0], sizes = [16, 16, 128], strides = [1, 1, 1]} : vector<18x18x128xf32> to vector<16x16x128xf32>
    %28 = vector.shape_cast %27 : vector<16x16x128xf32> to vector<256x128xf32>
    %29 = arith.truncf %28 : vector<256x128xf32> to vector<256x128xbf16>
    %c0_10 = arith.constant 0 : index
    %c768 = arith.constant 768 : index
    %30 = vector.load %arg7[%c0_10, %c768] : memref<256x1152xbf16, #tpu.memory_space<vmem>>, vector<256x128xbf16>
    tpu.vector_store %arg7[%c0_10, %c768], %29 {strides = array<i32>} : memref<256x1152xbf16, #tpu.memory_space<vmem>>, vector<256x128xbf16>,
    %31 = vector.extract_strided_slice %2 {offsets = [2, 1, 0], sizes = [16, 16, 128], strides = [1, 1, 1]} : vector<18x18x128xf32> to vector<16x16x128xf32>
    %32 = vector.shape_cast %31 : vector<16x16x128xf32> to vector<256x128xf32>
    %33 = arith.truncf %32 : vector<256x128xf32> to vector<256x128xbf16>
    %c0_11 = arith.constant 0 : index
    %c896 = arith.constant 896 : index
    %34 = vector.load %arg7[%c0_11, %c896] : memref<256x1152xbf16, #tpu.memory_space<vmem>>, vector<256x128xbf16>
    tpu.vector_store %arg7[%c0_11, %c896], %33 {strides = array<i32>} : memref<256x1152xbf16, #tpu.memory_space<vmem>>, vector<256x128xbf16>,
    %35 = vector.extract_strided_slice %2 {offsets = [2, 2, 0], sizes = [16, 16, 128], strides = [1, 1, 1]} : vector<18x18x128xf32> to vector<16x16x128xf32>
    %36 = vector.shape_cast %35 : vector<16x16x128xf32> to vector<256x128xf32>
    %37 = arith.truncf %36 : vector<256x128xf32> to vector<256x128xbf16>
    %c0_12 = arith.constant 0 : index
    %c1024 = arith.constant 1024 : index
    %38 = vector.load %arg7[%c0_12, %c1024] : memref<256x1152xbf16, #tpu.memory_space<vmem>>, vector<256x128xbf16>
    tpu.vector_store %arg7[%c0_12, %c1024], %37 {strides = array<i32>} : memref<256x1152xbf16, #tpu.memory_space<vmem>>, vector<256x128xbf16>,
    %c0_13 = arith.constant 0 : index
    %c0_14 = arith.constant 0 : index
    %39 = vector.load %arg7[%c0_13, %c0_14] : memref<256x1152xbf16, #tpu.memory_space<vmem>>, vector<256x1152xbf16>
    %c0_15 = arith.constant 0 : index
    %c0_16 = arith.constant 0 : index
    %40 = vector.load %arg2[%c0_15, %c0_16] : memref<1152x128xbf16, #tpu.memory_space<vmem>>, vector<1152x128xbf16>
    %cst = arith.constant dense<0.000000e+00> : vector<256x128xf32>
    %41 = tpu.matmul %39, %40, %cst {dimension_numbers = #tpu.dot_dimension_numbers<[1], [0], [0], [1], [0, 0, 1, 1], [], []>} : vector<256x1152xbf16>, vector<1152x128xbf16>, vector<256x128xf32> -> vector<256x128xf32>
    %cst_17 = arith.constant dense<0.000000e+00> : vector<128xf32>
    %42 = vector.multi_reduction <add>, %41, %cst_17 [0] : vector<256x128xf32> to vector<128xf32>
    %43 = vector.shape_cast %42 : vector<128xf32> to vector<1x128xf32>
    %44 = arith.mulf %41, %41 : vector<256x128xf32>
    %cst_18 = arith.constant dense<0.000000e+00> : vector<128xf32>
    %45 = vector.multi_reduction <add>, %44, %cst_18 [0] : vector<256x128xf32> to vector<128xf32>
    %46 = vector.shape_cast %45 : vector<128xf32> to vector<1x128xf32>
    %47 = tpu.concatenate %43, %46 in 0 : vector<1x128xf32>, vector<1x128xf32> -> vector<2x128xf32>
    %48 = vector.shape_cast %47 : vector<2x128xf32> to vector<1x2x128xf32>
    %c0_19 = arith.constant 0 : index
    %c0_20 = arith.constant 0 : index
    %c0_21 = arith.constant 0 : index
    %49 = vector.load %arg6[%c0_19, %c0_20, %c0_21] : memref<1x2x128xf32, #tpu.memory_space<vmem>>, vector<1x2x128xf32>
    tpu.vector_store %arg6[%c0_19, %c0_20, %c0_21], %48 {strides = array<i32>} : memref<1x2x128xf32, #tpu.memory_space<vmem>>, vector<1x2x128xf32>,
    %50 = vector.shape_cast %41 : vector<256x128xf32> to vector<1x16x16x128xf32>
    %c0_22 = arith.constant 0 : index
    %c0_23 = arith.constant 0 : index
    %c0_24 = arith.constant 0 : index
    %c0_25 = arith.constant 0 : index
    %51 = vector.load %arg5[%c0_22, %c0_23, %c0_24, %c0_25] : memref<1x16x16x128xf32, #tpu.memory_space<vmem>>, vector<1x16x16x128xf32>
    tpu.vector_store %arg5[%c0_22, %c0_23, %c0_24, %c0_25], %50 {strides = array<i32>} : memref<1x16x16x128xf32, #tpu.memory_space<vmem>>, vector<1x16x16x128xf32>,
    return
  }
  func.func @transform_0(%arg0: i32) -> (i32, i32, i32, i32) {
    %c0_i32 = arith.constant 0 : i32
    %c0_i32_0 = arith.constant 0 : i32
    %c0_i32_1 = arith.constant 0 : i32
    %c0_i32_2 = arith.constant 0 : i32
    return %arg0, %c0_i32, %c0_i32_0, %c0_i32_1 : i32, i32, i32, i32
  }
  func.func @transform_1(%arg0: i32) -> (i32, i32) {
    %c0_i32 = arith.constant 0 : i32
    %c0_i32_0 = arith.constant 0 : i32
    %c0_i32_1 = arith.constant 0 : i32
    return %c0_i32, %c0_i32_0 : i32, i32
  }
  func.func @transform_2(%arg0: i32) -> (i32, i32) {
    %c0_i32 = arith.constant 0 : i32
    %c0_i32_0 = arith.constant 0 : i32
    %c0_i32_1 = arith.constant 0 : i32
    return %c0_i32, %c0_i32_0 : i32, i32
  }
  func.func @transform_3(%arg0: i32) -> (i32, i32) {
    %c0_i32 = arith.constant 0 : i32
    %c0_i32_0 = arith.constant 0 : i32
    %c0_i32_1 = arith.constant 0 : i32
    return %c0_i32, %c0_i32_0 : i32, i32
  }
  func.func @transform_4(%arg0: i32) -> (i32, i32, i32, i32) {
    %c0_i32 = arith.constant 0 : i32
    %c0_i32_0 = arith.constant 0 : i32
    %c0_i32_1 = arith.constant 0 : i32
    %c0_i32_2 = arith.constant 0 : i32
    return %arg0, %c0_i32, %c0_i32_0, %c0_i32_1 : i32, i32, i32, i32
  }
  func.func @transform_5(%arg0: i32) -> (i32, i32, i32) {
    %c0_i32 = arith.constant 0 : i32
    %c0_i32_0 = arith.constant 0 : i32
    %c0_i32_1 = arith.constant 0 : i32
    return %arg0, %c0_i32, %c0_i32_0 : i32, i32, i32
  }
}

</mosaic_0001>

<llo_original>
// kernel: tpu_custom_call.1
$region0: #{tpu_custom_call.1}
  #allocation0 [shape = 'u32[]', space=smem, size = 0x4, offset = 0x4, fixed_abs, tag = 'smem constant byte address 0x4 - core index']
  #allocation1 [shape = 'u32[144,128]{1,0:T(1,128)}', space=vmem, size = 0x12000, scoped, tag = 'internal scratch']
  #allocation2 [shape = 'bf16[256,1152]{1,0:T(16,128)(2,1)}', space=vmem, size = 0x90000, scoped, tag = 'scratch operand']
  %s0 = inlined_call_operand.vmem [shape: bf16[2,18,18,128], index: 0, kind: input, shape index: {}]
  %s1 = inlined_call_operand.vmem [shape: bf16[1152,128], index: 1, kind: input, shape index: {}]
  %s2 = inlined_call_operand.vmem [shape: f32[1,128], index: 2, kind: input, shape index: {}]
  %s3 = inlined_call_operand.vmem [shape: f32[1,128], index: 3, kind: input, shape index: {}]
  %s4 = inlined_call_operand.hbm [shape: f32[2,16,16,128], index: 4, kind: output, shape index: {0}]
  %s5 = inlined_call_operand.hbm [shape: f32[2,2,128], index: 5, kind: output, shape index: {1}]
  %6 = xla_tuple %s4, %s5
  %s7 = sld [smem:[#allocation0]]
  $region57: #{tpu_custom_call.1} parent=0
    _
  %s9 = ssub.s32 1, %s7
  %s10 = scalar_select 0, %s9, %s7
  $region1: #{tpu_custom_call.1} parent=0
    #allocation3 [shape = 'u8[262144]{0}', space=vmem, size = 0x40000, scoped, tag = 'output window, operand 0']
    #allocation4 [shape = 's32[2]{0}', space=sflag, size = 0x8, scoped, tag = 'scoped memory for tpu_custom_call.1']
    #allocation5 [shape = 'u8[2048]{0}', space=vmem, size = 0x800, scoped, tag = 'output window, operand 1']
    #allocation6 [shape = 's32[2]{0}', space=sflag, size = 0x8, scoped, tag = 'scoped memory for tpu_custom_call.1']
    %11 = vsyncpa [#allocation4], 0
    %s12 = scalar_lea.sflag [#allocation4], 1
    %13 = vsyncpa %s12, 0
    %14 = vsyncpa [#allocation6], 0
    %s15 = scalar_lea.sflag [#allocation6], 1
    %16 = vsyncpa %s15, 0
    loop: start=0, step=1, limit=4
    $region2: #{tpu_custom_call.1} parent=1 // loop_pre_header
      _
    $region3: #{tpu_custom_call.1} parent=1 // loop_header
      %s18 = sphi 0, %s22
      %p19 = scmp.ge.s32.totalorder %s18, 4
      %s28 = sphi 0, %s30
      %s31 = sphi 0, %s28
      %s32 = sphi 0, %s31
      %s48 = sphi 0, %s32
      %s52 = sphi 0, %s52
      %s54 = sphi 0, %s52
      %s55 = sphi 0, %s54
      %s69 = sphi 0, %s55
      %s73 = sphi 0, %s73
      %s75 = sphi 0, %s73
      %s76 = sphi 0, %s75
      %s90 = sphi 0, %s76
      %s94 = sphi 0, %s94
      %s96 = sphi 0, %s94
      %s97 = sphi 0, %s96
      %s111 = sphi 0, %s97
      %s117 = sphi 0, %s119
      %s120 = sphi 0, %s117
      %s121 = sphi 0, %s120
      %s137 = sphi 0, %s121
      %s143 = sphi 0, %s145
      %s146 = sphi 0, %s143
      %s147 = sphi 0, %s146
      %s163 = sphi 0, %s147
    $region4: #{tpu_custom_call.1} parent=1 // loop_header_branch
      %21 = sbr.rel (%p19) target = $region8
    $region5: #{tpu_custom_call.1} parent=1 // loop_body
      %s23 = ssub.s32 %s18, 1
      %s24 = ssub.s32 %s18, 2
      %s25 = sadd.s32 %s18, 1
      %s26 = ssub.s32 %s18, %s25
      %p27 = scmp.eq.s32.totalorder %s26, 0
      %s29 = sadd.s32 %s28, 1
      %s30 = scalar_select %p27, %s28, %s29
      %p33 = pneg %p27
      %p34 = scmp.eq.s32.totalorder %s18, 1
      %p35 = por %p33, %p34
      %p36 = scmp.ne.s32.totalorder %s28, %s31
      %p37 = scmp.eq.s32.totalorder %s18, 0
      %p38 = por %p36, %p37
      %p39 = scmp.ne.s32.totalorder %s28, %s31
      %p40 = scmp.eq.s32.totalorder %s23, 1
      %p41 = por %p39, %p40
      %p42 = scmp.ne.s32.totalorder %s31, %s32
      %p43 = scmp.eq.s32.totalorder %s23, 0
      %p44 = por %p42, %p43
      %p45 = scmp.ne.s32.totalorder %s31, %s32
      %p46 = scmp.eq.s32.totalorder %s24, 1
      %p47 = por %p45, %p46
      %p49 = scmp.ne.s32.totalorder %s32, %s48
      %p50 = scmp.eq.s32.totalorder %s24, 0
      %p51 = por %p49, %p50
      %s53 = sadd.s32 %s52, 1
      %p56 = scmp.eq.s32.totalorder %s18, 1
      %p57 = scmp.ne.s32.totalorder %s52, %s54
      %p58 = scmp.eq.s32.totalorder %s18, 0
      %p59 = por %p57, %p58
      %p60 = scmp.ne.s32.totalorder %s52, %s54
      %p61 = scmp.eq.s32.totalorder %s23, 1
      %p62 = por %p60, %p61
      %p63 = scmp.ne.s32.totalorder %s54, %s55
      %p64 = scmp.eq.s32.totalorder %s23, 0
      %p65 = por %p63, %p64
      %p66 = scmp.ne.s32.totalorder %s54, %s55
      %p67 = scmp.eq.s32.totalorder %s24, 1
      %p68 = por %p66, %p67
      %p70 = scmp.ne.s32.totalorder %s55, %s69
      %p71 = scmp.eq.s32.totalorder %s24, 0
      %p72 = por %p70, %p71
      %s74 = sadd.s32 %s73, 1
      %p77 = scmp.eq.s32.totalorder %s18, 1
      %p78 = scmp.ne.s32.totalorder %s73, %s75
      %p79 = scmp.eq.s32.totalorder %s18, 0
      %p80 = por %p78, %p79
      %p81 = scmp.ne.s32.totalorder %s73, %s75
      %p82 = scmp.eq.s32.totalorder %s23, 1
      %p83 = por %p81, %p82
      %p84 = scmp.ne.s32.totalorder %s75, %s76
      %p85 = scmp.eq.s32.totalorder %s23, 0
      %p86 = por %p84, %p85
      %p87 = scmp.ne.s32.totalorder %s75, %s76
      %p88 = scmp.eq.s32.totalorder %s24, 1
      %p89 = por %p87, %p88
      %p91 = scmp.ne.s32.totalorder %s76, %s90
      %p92 = scmp.eq.s32.totalorder %s24, 0
      %p93 = por %p91, %p92
      %s95 = sadd.s32 %s94, 1
      %p98 = scmp.eq.s32.totalorder %s18, 1
      %p99 = scmp.ne.s32.totalorder %s94, %s96
      %p100 = scmp.eq.s32.totalorder %s18, 0
      %p101 = por %p99, %p100
      %p102 = scmp.ne.s32.totalorder %s94, %s96
      %p103 = scmp.eq.s32.totalorder %s23, 1
      %p104 = por %p102, %p103
      %p105 = scmp.ne.s32.totalorder %s96, %s97
      %p106 = scmp.eq.s32.totalorder %s23, 0
      %p107 = por %p105, %p106
      %p108 = scmp.ne.s32.totalorder %s96, %s97
      %p109 = scmp.eq.s32.totalorder %s24, 1
      %p110 = por %p108, %p109
      %p112 = scmp.ne.s32.totalorder %s97, %s111
      %p113 = scmp.eq.s32.totalorder %s24, 0
      %p114 = por %p112, %p113
      %s115 = ssub.s32 %s18, %s25
      %p116 = scmp.eq.s32.totalorder %s115, 0
      %s118 = sadd.s32 %s117, 1
      %s119 = scalar_select %p116, %s117, %s118
      %p122 = pneg %p116
      %p123 = scmp.eq.s32.totalorder %s18, 1
      %p124 = por %p122, %p123
      %p125 = scmp.ne.s32.totalorder %s117, %s120
      %p126 = scmp.eq.s32.totalorder %s18, 0
      %p127 = por %p125, %p126
      %p128 = scmp.ne.s32.totalorder %s117, %s120
      %p129 = scmp.eq.s32.totalorder %s23, 1
      %p130 = por %p128, %p129
      %p131 = scmp.ne.s32.totalorder %s120, %s121
      %p132 = scmp.eq.s32.totalorder %s23, 0
      %p133 = por %p131, %p132
      %p134 = scmp.ne.s32.totalorder %s120, %s121
      %p135 = scmp.eq.s32.totalorder %s24, 1
      %p136 = por %p134, %p135
      %p138 = scmp.ne.s32.totalorder %s121, %s137
      %p139 = scmp.eq.s32.totalorder %s24, 0
      %p140 = por %p138, %p139
      %s141 = ssub.s32 %s18, %s25
      %p142 = scmp.eq.s32.totalorder %s141, 0
      %s144 = sadd.s32 %s143, 1
      %s145 = scalar_select %p142, %s143, %s144
      %p148 = pneg %p142
      %p149 = scmp.eq.s32.totalorder %s18, 1
      %p150 = por %p148, %p149
      %p151 = scmp.ne.s32.totalorder %s143, %s146
      %p152 = scmp.eq.s32.totalorder %s18, 0
      %p153 = por %p151, %p152
      %p154 = scmp.ne.s32.totalorder %s143, %s146
      %p155 = scmp.eq.s32.totalorder %s23, 1
      %p156 = por %p154, %p155
      %p157 = scmp.ne.s32.totalorder %s146, %s147
      %p158 = scmp.eq.s32.totalorder %s23, 0
      %p159 = por %p157, %p158
      %p160 = scmp.ne.s32.totalorder %s146, %s147
      %p161 = scmp.eq.s32.totalorder %s24, 1
      %p162 = por %p160, %p161
      %p164 = scmp.ne.s32.totalorder %s147, %s163
      %p165 = scmp.eq.s32.totalorder %s24, 0
      %p166 = por %p164, %p165
      %p167 = scmp.le.s32.totalorder 1, %s18
      %p168 = scmp.lt.s32.totalorder %s18, 3
      %p169 = pnand %p167, %p168
      %p170 = pneg %p169
      // Predicated region
      $region9: #{tpu_custom_call.1} parent=5 // pred_check
        _
      $region10: #{tpu_custom_call.1} parent=5 // pred_check_branch
        %172 = sbr.rel (%p169) target = $region12
      $region11: #{tpu_custom_call.1} parent=5 // pred_region
        %s173 = ssub.s32 %s18, 1
        // Predicated region
        $region13: #{tpu_custom_call.1} parent=11 // pred_check
          %p174 = pneg %p65
        $region14: #{tpu_custom_call.1} parent=11 // pred_check_branch
          %176 = sbr.rel (%p174) target = $region16
        $region15: #{tpu_custom_call.1} parent=11 // pred_region
          _
        $region16: #{tpu_custom_call.1} parent=11 // pred_fallthru
          _
        // Predicated region
        $region17: #{tpu_custom_call.1} parent=11 // pred_check
          %p177 = pneg %p86
        $region18: #{tpu_custom_call.1} parent=11 // pred_check_branch
          %179 = sbr.rel (%p177) target = $region20
        $region19: #{tpu_custom_call.1} parent=11 // pred_region
          _
        $region20: #{tpu_custom_call.1} parent=11 // pred_fallthru
          _
        // Predicated region
        $region21: #{tpu_custom_call.1} parent=11 // pred_check
          %p180 = pneg %p107
        $region22: #{tpu_custom_call.1} parent=11 // pred_check_branch
          %182 = sbr.rel (%p180) target = $region24
        $region23: #{tpu_custom_call.1} parent=11 // pred_region
          _
        $region24: #{tpu_custom_call.1} parent=11 // pred_fallthru
          _
      $region12: #{tpu_custom_call.1} parent=5 // pred_fallthru
        _
      %p183 = scmp.lt.s32.totalorder %s18, 2
      // Predicated region
      $region25: #{tpu_custom_call.1} parent=5 // pred_check
        %p184 = pneg %p183
      $region26: #{tpu_custom_call.1} parent=5 // pred_check_branch
        %186 = sbr.rel (%p184) target = $region28
      $region27: #{tpu_custom_call.1} parent=5 // pred_region
        // Predicated region
        $region29: #{tpu_custom_call.1} parent=27 // pred_check
          %p187 = pneg %p38
        $region30: #{tpu_custom_call.1} parent=27 // pred_check_branch
          %189 = sbr.rel (%p187) target = $region32
        $region31: #{tpu_custom_call.1} parent=27 // pred_region
          %p190 = scmp.lt.s32.totalorder %s18, 1
          %s191 = scalar_select %p190, %s18, 1
          %s192 = smul.addr %s191, 54
          %s193 = smul.addr %s192, 4
          %s194 = scalar_lea.vmem %s0, %s193
        $region32: #{tpu_custom_call.1} parent=27 // pred_fallthru
          _
      $region28: #{tpu_custom_call.1} parent=5 // pred_fallthru
        _
      %p195 = scmp.le.s32.totalorder 1, %s18
      %p196 = scmp.lt.s32.totalorder %s18, 3
      %p197 = pnand %p195, %p196
      %p198 = pneg %p197
      // Predicated region
      $region33: #{tpu_custom_call.1} parent=5 // pred_check
        _
      $region34: #{tpu_custom_call.1} parent=5 // pred_check_branch
        %200 = sbr.rel (%p197) target = $region36
      $region35: #{tpu_custom_call.1} parent=5 // pred_region
        %s201 = ssub.s32 %s18, 1
        %p202 = scmp.lt.s32.totalorder %s23, 1
        %s203 = scalar_select %p202, %s23, 1
        %s204 = smul.addr %s203, 54
        %s205 = smul.addr %s204, 4
        %s206 = scalar_lea.vmem %s0, %s205
        %p207 = pneg %p44
        %p208 = pneg %p41
        %p209 = pneg %p65
        %p210 = pneg %p62
        %p211 = pneg %p86
        %p212 = pneg %p83
        %p213 = pneg %p107
        %p214 = pneg %p104
        %p215 = pneg %p133
        %p216 = pneg %p130
        %s217 = sand.u32 %s120, 1
        %s218 = scalar_lea.sflag [#allocation4], %s217
        %s219 = sand.u32 %s120, 1
        %s220 = smul.addr %s219, 256
        %s221 = scalar_lea.vmem [#allocation3], %s220
        %p222 = pneg %p159
        %p223 = pneg %p156
        %s224 = sand.u32 %s146, 1
        %s225 = scalar_lea.sflag [#allocation6], %s224
        %s226 = sand.u32 %s146, 1
        %s227 = smul.addr %s226, 2
        %s228 = scalar_lea.vmem [#allocation5], %s227
        %p229 = scmp.lt.s32.totalorder %s23, 1
        %s230 = scalar_select %p229, %s23, 1
        %s231 = smul.addr %s230, 54
        %s232 = smul.addr %s231, 4
        %s233 = scalar_lea.vmem %s0, %s232
        %v235 = vld [vmem:[%s233] sm:$0xf]
        %v236 = vld [vmem:[%s233 + $0x4] sm:$0xf]
        %v237 = vld [vmem:[%s233 + $0x8] sm:$0x1]
        %v238 = vld [vmem:[%s233 + $0xc] sm:$0xf]
        %v239 = vld [vmem:[%s233 + $0x10] sm:$0xf]
        %v240 = vld [vmem:[%s233 + $0x14] sm:$0x1]
        %v241 = vld [vmem:[%s233 + $0x18] sm:$0xf]
        %v242 = vld [vmem:[%s233 + $0x1c] sm:$0xf]
        %v243 = vld [vmem:[%s233 + $0x20] sm:$0x1]
        %v244 = vld [vmem:[%s233 + $0x24] sm:$0xf]
        %v245 = vld [vmem:[%s233 + $0x28] sm:$0xf]
        %v246 = vld [vmem:[%s233 + $0x2c] sm:$0x1]
        %v247 = vld [vmem:[%s233 + $0x30] sm:$0xf]
        %v248 = vld [vmem:[%s233 + $0x34] sm:$0xf]
        %v249 = vld [vmem:[%s233 + $0x38] sm:$0x1]
        %v250 = vld [vmem:[%s233 + $0x3c] sm:$0xf]
        %v251 = vld [vmem:[%s233 + $0x40] sm:$0xf]
        %v252 = vld [vmem:[%s233 + $0x44] sm:$0x1]
        %v253 = vld [vmem:[%s233 + $0x48] sm:$0xf]
        %v254 = vld [vmem:[%s233 + $0x4c] sm:$0xf]
        %v255 = vld [vmem:[%s233 + $0x50] sm:$0x1]
        %v256 = vld [vmem:[%s233 + $0x54] sm:$0xf]
        %v257 = vld [vmem:[%s233 + $0x58] sm:$0xf]
        %v258 = vld [vmem:[%s233 + $0x5c] sm:$0x1]
        %v259 = vld [vmem:[%s233 + $0x60] sm:$0xf]
        %v260 = vld [vmem:[%s233 + $0x64] sm:$0xf]
        %v261 = vld [vmem:[%s233 + $0x68] sm:$0x1]
        %v262 = vld [vmem:[%s233 + $0x6c] sm:$0xf]
        %v263 = vld [vmem:[%s233 + $0x70] sm:$0xf]
        %v264 = vld [vmem:[%s233 + $0x74] sm:$0x1]
        %v265 = vld [vmem:[%s233 + $0x78] sm:$0xf]
        %v266 = vld [vmem:[%s233 + $0x7c] sm:$0xf]
        %v267 = vld [vmem:[%s233 + $0x80] sm:$0x1]
        %v268 = vld [vmem:[%s233 + $0x84] sm:$0xf]
        %v269 = vld [vmem:[%s233 + $0x88] sm:$0xf]
        %v270 = vld [vmem:[%s233 + $0x8c] sm:$0x1]
        %v271 = vld [vmem:[%s233 + $0x90] sm:$0xf]
        %v272 = vld [vmem:[%s233 + $0x94] sm:$0xf]
        %v273 = vld [vmem:[%s233 + $0x98] sm:$0x1]
        %v274 = vld [vmem:[%s233 + $0x9c] sm:$0xf]
        %v275 = vld [vmem:[%s233 + $0xa0] sm:$0xf]
        %v276 = vld [vmem:[%s233 + $0xa4] sm:$0x1]
        %v277 = vld [vmem:[%s233 + $0xa8] sm:$0xf]
        %v278 = vld [vmem:[%s233 + $0xac] sm:$0xf]
        %v279 = vld [vmem:[%s233 + $0xb0] sm:$0x1]
        %v280 = vld [vmem:[%s233 + $0xb4] sm:$0xf]
        %v281 = vld [vmem:[%s233 + $0xb8] sm:$0xf]
        %v282 = vld [vmem:[%s233 + $0xbc] sm:$0x1]
        %v283 = vld [vmem:[%s233 + $0xc0] sm:$0xf]
        %v284 = vld [vmem:[%s233 + $0xc4] sm:$0xf]
        %v285 = vld [vmem:[%s233 + $0xc8] sm:$0x1]
        %v286 = vld [vmem:[%s233 + $0xcc] sm:$0xf]
        %v287 = vld [vmem:[%s233 + $0xd0] sm:$0xf]
        %v288 = vld [vmem:[%s233 + $0xd4] sm:$0x1]
        %v289 = vunpack.c.l.bf16 %v235
        %v290 = vunpack.c.l.bf16 %v236
        %v291 = vunpack.c.l.bf16 %v237
        %v292 = vunpack.c.l.bf16 %v238
        %v293 = vunpack.c.l.bf16 %v239
        %v294 = vunpack.c.l.bf16 %v240
        %v295 = vunpack.c.l.bf16 %v241
        %v296 = vunpack.c.l.bf16 %v242
        %v297 = vunpack.c.l.bf16 %v243
        %v298 = vunpack.c.l.bf16 %v244
        %v299 = vunpack.c.l.bf16 %v245
        %v300 = vunpack.c.l.bf16 %v246
        %v301 = vunpack.c.l.bf16 %v247
        %v302 = vunpack.c.l.bf16 %v248
        %v303 = vunpack.c.l.bf16 %v249
        %v304 = vunpack.c.l.bf16 %v250
        %v305 = vunpack.c.l.bf16 %v251
        %v306 = vunpack.c.l.bf16 %v252
        %v307 = vunpack.c.l.bf16 %v253
        %v308 = vunpack.c.l.bf16 %v254
        %v309 = vunpack.c.l.bf16 %v255
        %v310 = vunpack.c.l.bf16 %v256
        %v311 = vunpack.c.l.bf16 %v257
        %v312 = vunpack.c.l.bf16 %v258
        %v313 = vunpack.c.l.bf16 %v259
        %v314 = vunpack.c.l.bf16 %v260
        %v315 = vunpack.c.l.bf16 %v261
        %v316 = vunpack.c.l.bf16 %v262
        %v317 = vunpack.c.l.bf16 %v263
        %v318 = vunpack.c.l.bf16 %v264
        %v319 = vunpack.c.l.bf16 %v265
        %v320 = vunpack.c.l.bf16 %v266
        %v321 = vunpack.c.l.bf16 %v267
        %v322 = vunpack.c.l.bf16 %v268
        %v323 = vunpack.c.l.bf16 %v269
        %v324 = vunpack.c.l.bf16 %v270
        %v325 = vunpack.c.l.bf16 %v271
        %v326 = vunpack.c.l.bf16 %v272
        %v327 = vunpack.c.l.bf16 %v273
        %v328 = vunpack.c.l.bf16 %v274
        %v329 = vunpack.c.l.bf16 %v275
        %v330 = vunpack.c.l.bf16 %v276
        %v331 = vunpack.c.l.bf16 %v277
        %v332 = vunpack.c.l.bf16 %v278
        %v333 = vunpack.c.l.bf16 %v279
        %v334 = vunpack.c.l.bf16 %v280
        %v335 = vunpack.c.l.bf16 %v281
        %v336 = vunpack.c.l.bf16 %v282
        %v337 = vunpack.c.l.bf16 %v283
        %v338 = vunpack.c.l.bf16 %v284
        %v339 = vunpack.c.l.bf16 %v285
        %v340 = vunpack.c.l.bf16 %v286
        %v341 = vunpack.c.l.bf16 %v287
        %v342 = vunpack.c.l.bf16 %v288
        %v343 = vpack.c.bf16 %v290, %v289
        %v344 = vpack.c.bf16 %v293, %v292
        %v345 = vpack.c.bf16 %v296, %v295
        %v346 = vpack.c.bf16 %v299, %v298
        %v347 = vpack.c.bf16 %v302, %v301
        %v348 = vpack.c.bf16 %v305, %v304
        %v349 = vpack.c.bf16 %v308, %v307
        %v350 = vpack.c.bf16 %v311, %v310
        %v351 = vpack.c.bf16 %v314, %v313
        %v352 = vpack.c.bf16 %v317, %v316
        %v353 = vpack.c.bf16 %v320, %v319
        %v354 = vpack.c.bf16 %v323, %v322
        %v355 = vpack.c.bf16 %v326, %v325
        %v356 = vpack.c.bf16 %v329, %v328
        %v357 = vpack.c.bf16 %v332, %v331
        %v358 = vpack.c.bf16 %v335, %v334
        %359 = vst [vmem:[#allocation2] sm:$0xff] %v343
        %360 = vst [vmem:[#allocation2 + $0x48] sm:$0xff] %v344
        %361 = vst [vmem:[#allocation2 + $0x90] sm:$0xff] %v345
        %362 = vst [vmem:[#allocation2 + $0xd8] sm:$0xff] %v346
        %363 = vst [vmem:[#allocation2 + $0x120] sm:$0xff] %v347
        %364 = vst [vmem:[#allocation2 + $0x168] sm:$0xff] %v348
        %365 = vst [vmem:[#allocation2 + $0x1b0] sm:$0xff] %v349
        %366 = vst [vmem:[#allocation2 + $0x1f8] sm:$0xff] %v350
        %367 = vst [vmem:[#allocation2 + $0x240] sm:$0xff] %v351
        %368 = vst [vmem:[#allocation2 + $0x288] sm:$0xff] %v352
        %369 = vst [vmem:[#allocation2 + $0x2d0] sm:$0xff] %v353
        %370 = vst [vmem:[#allocation2 + $0x318] sm:$0xff] %v354
        %371 = vst [vmem:[#allocation2 + $0x360] sm:$0xff] %v355
        %372 = vst [vmem:[#allocation2 + $0x3a8] sm:$0xff] %v356
        %373 = vst [vmem:[#allocation2 + $0x3f0] sm:$0xff] %v357
        %374 = vst [vmem:[#allocation2 + $0x438] sm:$0xff] %v358
        %vm423 = vcmask 1046528
        %v424 = vrot.slane %v289, 1
        %v425 = vrot.slane %v290, 1
        %v426 = vsel %vm423, %v424, %v425
        %v427 = vrot.slane %v291, 1
        %v428 = vsel %vm423, %v425, %v427
        %v429 = vrot.slane %v292, 1
        %v430 = vrot.slane %v293, 1
        %v431 = vsel %vm423, %v429, %v430
        %v432 = vrot.slane %v294, 1
        %v433 = vsel %vm423, %v430, %v432
        %v434 = vrot.slane %v295, 1
        %v435 = vrot.slane %v296, 1
        %v436 = vsel %vm423, %v434, %v435
        %v437 = vrot.slane %v297, 1
        %v438 = vsel %vm423, %v435, %v437
        %v439 = vrot.slane %v298, 1
        %v440 = vrot.slane %v299, 1
        %v441 = vsel %vm423, %v439, %v440
        %v442 = vrot.slane %v300, 1
        %v443 = vsel %vm423, %v440, %v442
        %v444 = vrot.slane %v301, 1
        %v445 = vrot.slane %v302, 1
        %v446 = vsel %vm423, %v444, %v445
        %v447 = vrot.slane %v303, 1
        %v448 = vsel %vm423, %v445, %v447
        %v449 = vrot.slane %v304, 1
        %v450 = vrot.slane %v305, 1
        %v451 = vsel %vm423, %v449, %v450
        %v452 = vrot.slane %v306, 1
        %v453 = vsel %vm423, %v450, %v452
        %v454 = vrot.slane %v307, 1
        %v455 = vrot.slane %v308, 1
        %v456 = vsel %vm423, %v454, %v455
        %v457 = vrot.slane %v309, 1
        %v458 = vsel %vm423, %v455, %v457
        %v459 = vrot.slane %v310, 1
        %v460 = vrot.slane %v311, 1
        %v461 = vsel %vm423, %v459, %v460
        %v462 = vrot.slane %v312, 1
        %v463 = vsel %vm423, %v460, %v462
        %v464 = vrot.slane %v313, 1
        %v465 = vrot.slane %v314, 1
        %v466 = vsel %vm423, %v464, %v465
        %v467 = vrot.slane %v315, 1
        %v468 = vsel %vm423, %v465, %v467
        %v469 = vrot.slane %v316, 1
        %v470 = vrot.slane %v317, 1
        %v471 = vsel %vm423, %v469, %v470
        %v472 = vrot.slane %v318, 1
        %v473 = vsel %vm423, %v470, %v472
        %v474 = vrot.slane %v319, 1
        %v475 = vrot.slane %v320, 1
        %v476 = vsel %vm423, %v474, %v475
        %v477 = vrot.slane %v321, 1
        %v478 = vsel %vm423, %v475, %v477
        %v479 = vrot.slane %v322, 1
        %v480 = vrot.slane %v323, 1
        %v481 = vsel %vm423, %v479, %v480
        %v482 = vrot.slane %v324, 1
        %v483 = vsel %vm423, %v480, %v482
        %v484 = vrot.slane %v325, 1
        %v485 = vrot.slane %v326, 1
        %v486 = vsel %vm423, %v484, %v485
        %v487 = vrot.slane %v327, 1
        %v488 = vsel %vm423, %v485, %v487
        %v489 = vrot.slane %v328, 1
        %v490 = vrot.slane %v329, 1
        %v491 = vsel %vm423, %v489, %v490
        %v492 = vrot.slane %v330, 1
        %v493 = vsel %vm423, %v490, %v492
        %v494 = vrot.slane %v331, 1
        %v495 = vrot.slane %v332, 1
        %v496 = vsel %vm423, %v494, %v495
        %v497 = vrot.slane %v333, 1
        %v498 = vsel %vm423, %v495, %v497
        %v499 = vrot.slane %v334, 1
        %v500 = vrot.slane %v335, 1
        %v501 = vsel %vm423, %v499, %v500
        %v502 = vrot.slane %v336, 1
        %v503 = vsel %vm423, %v500, %v502
        %v536 = vpack.c.bf16 %v428, %v426
        %v537 = vpack.c.bf16 %v433, %v431
        %v538 = vpack.c.bf16 %v438, %v436
        %v539 = vpack.c.bf16 %v443, %v441
        %v540 = vpack.c.bf16 %v448, %v446
        %v541 = vpack.c.bf16 %v453, %v451
        %v542 = vpack.c.bf16 %v458, %v456
        %v543 = vpack.c.bf16 %v463, %v461
        %v544 = vpack.c.bf16 %v468, %v466
        %v545 = vpack.c.bf16 %v473, %v471
        %v546 = vpack.c.bf16 %v478, %v476
        %v547 = vpack.c.bf16 %v483, %v481
        %v548 = vpack.c.bf16 %v488, %v486
        %v549 = vpack.c.bf16 %v493, %v491
        %v550 = vpack.c.bf16 %v498, %v496
        %v551 = vpack.c.bf16 %v503, %v501
        %552 = vst [vmem:[#allocation2 + $0x8] sm:$0xff] %v536
        %553 = vst [vmem:[#allocation2 + $0x50] sm:$0xff] %v537
        %554 = vst [vmem:[#allocation2 + $0x98] sm:$0xff] %v538
        %555 = vst [vmem:[#allocation2 + $0xe0] sm:$0xff] %v539
        %556 = vst [vmem:[#allocation2 + $0x128] sm:$0xff] %v540
        %557 = vst [vmem:[#allocation2 + $0x170] sm:$0xff] %v541
        %558 = vst [vmem:[#allocation2 + $0x1b8] sm:$0xff] %v542
        %559 = vst [vmem:[#allocation2 + $0x200] sm:$0xff] %v543
        %560 = vst [vmem:[#allocation2 + $0x248] sm:$0xff] %v544
        %561 = vst [vmem:[#allocation2 + $0x290] sm:$0xff] %v545
        %562 = vst [vmem:[#allocation2 + $0x2d8] sm:$0xff] %v546
        %563 = vst [vmem:[#allocation2 + $0x320] sm:$0xff] %v547
        %564 = vst [vmem:[#allocation2 + $0x368] sm:$0xff] %v548
        %565 = vst [vmem:[#allocation2 + $0x3b0] sm:$0xff] %v549
        %566 = vst [vmem:[#allocation2 + $0x3f8] sm:$0xff] %v550
        %567 = vst [vmem:[#allocation2 + $0x440] sm:$0xff] %v551
        %vm568 = vcmask 1045504
        %v569 = vrot.slane %v289, 2
        %v570 = vrot.slane %v290, 2
        %v571 = vsel %vm568, %v569, %v570
        %v572 = vrot.slane %v291, 2
        %v573 = vsel %vm568, %v570, %v572
        %v574 = vrot.slane %v292, 2
        %v575 = vrot.slane %v293, 2
        %v576 = vsel %vm568, %v574, %v575
        %v577 = vrot.slane %v294, 2
        %v578 = vsel %vm568, %v575, %v577
        %v579 = vrot.slane %v295, 2
        %v580 = vrot.slane %v296, 2
        %v581 = vsel %vm568, %v579, %v580
        %v582 = vrot.slane %v297, 2
        %v583 = vsel %vm568, %v580, %v582
        %v584 = vrot.slane %v298, 2
        %v585 = vrot.slane %v299, 2
        %v586 = vsel %vm568, %v584, %v585
        %v587 = vrot.slane %v300, 2
        %v588 = vsel %vm568, %v585, %v587
        %v589 = vrot.slane %v301, 2
        %v590 = vrot.slane %v302, 2
        %v591 = vsel %vm568, %v589, %v590
        %v592 = vrot.slane %v303, 2
        %v593 = vsel %vm568, %v590, %v592
        %v594 = vrot.slane %v304, 2
        %v595 = vrot.slane %v305, 2
        %v596 = vsel %vm568, %v594, %v595
        %v597 = vrot.slane %v306, 2
        %v598 = vsel %vm568, %v595, %v597
        %v599 = vrot.slane %v307, 2
        %v600 = vrot.slane %v308, 2
        %v601 = vsel %vm568, %v599, %v600
        %v602 = vrot.slane %v309, 2
        %v603 = vsel %vm568, %v600, %v602
        %v604 = vrot.slane %v310, 2
        %v605 = vrot.slane %v311, 2
        %v606 = vsel %vm568, %v604, %v605
        %v607 = vrot.slane %v312, 2
        %v608 = vsel %vm568, %v605, %v607
        %v609 = vrot.slane %v313, 2
        %v610 = vrot.slane %v314, 2
        %v611 = vsel %vm568, %v609, %v610
        %v612 = vrot.slane %v315, 2
        %v613 = vsel %vm568, %v610, %v612
        %v614 = vrot.slane %v316, 2
        %v615 = vrot.slane %v317, 2
        %v616 = vsel %vm568, %v614, %v615
        %v617 = vrot.slane %v318, 2
        %v618 = vsel %vm568, %v615, %v617
        %v619 = vrot.slane %v319, 2
        %v620 = vrot.slane %v320, 2
        %v621 = vsel %vm568, %v619, %v620
        %v622 = vrot.slane %v321, 2
        %v623 = vsel %vm568, %v620, %v622
        %v624 = vrot.slane %v322, 2
        %v625 = vrot.slane %v323, 2
        %v626 = vsel %vm568, %v624, %v625
        %v627 = vrot.slane %v324, 2
        %v628 = vsel %vm568, %v625, %v627
        %v629 = vrot.slane %v325, 2
        %v630 = vrot.slane %v326, 2
        %v631 = vsel %vm568, %v629, %v630
        %v632 = vrot.slane %v327, 2
        %v633 = vsel %vm568, %v630, %v632
        %v634 = vrot.slane %v328, 2
        %v635 = vrot.slane %v329, 2
        %v636 = vsel %vm568, %v634, %v635
        %v637 = vrot.slane %v330, 2
        %v638 = vsel %vm568, %v635, %v637
        %v639 = vrot.slane %v331, 2
        %v640 = vrot.slane %v332, 2
        %v641 = vsel %vm568, %v639, %v640
        %v642 = vrot.slane %v333, 2
        %v643 = vsel %vm568, %v640, %v642
        %v644 = vrot.slane %v334, 2
        %v645 = vrot.slane %v335, 2
        %v646 = vsel %vm568, %v644, %v645
        %v647 = vrot.slane %v336, 2
        %v648 = vsel %vm568, %v645, %v647
        %v681 = vpack.c.bf16 %v573, %v571
        %v682 = vpack.c.bf16 %v578, %v576
        %v683 = vpack.c.bf16 %v583, %v581
        %v684 = vpack.c.bf16 %v588, %v586
        %v685 = vpack.c.bf16 %v593, %v591
        %v686 = vpack.c.bf16 %v598, %v596
        %v687 = vpack.c.bf16 %v603, %v601
        %v688 = vpack.c.bf16 %v608, %v606
        %v689 = vpack.c.bf16 %v613, %v611
        %v690 = vpack.c.bf16 %v618, %v616
        %v691 = vpack.c.bf16 %v623, %v621
        %v692 = vpack.c.bf16 %v628, %v626
        %v693 = vpack.c.bf16 %v633, %v631
        %v694 = vpack.c.bf16 %v638, %v636
        %v695 = vpack.c.bf16 %v643, %v641
        %v696 = vpack.c.bf16 %v648, %v646
        %697 = vst [vmem:[#allocation2 + $0x10] sm:$0xff] %v681
        %698 = vst [vmem:[#allocation2 + $0x58] sm:$0xff] %v682
        %699 = vst [vmem:[#allocation2 + $0xa0] sm:$0xff] %v683
        %700 = vst [vmem:[#allocation2 + $0xe8] sm:$0xff] %v684
        %701 = vst [vmem:[#allocation2 + $0x130] sm:$0xff] %v685
        %702 = vst [vmem:[#allocation2 + $0x178] sm:$0xff] %v686
        %703 = vst [vmem:[#allocation2 + $0x1c0] sm:$0xff] %v687
        %704 = vst [vmem:[#allocation2 + $0x208] sm:$0xff] %v688
        %705 = vst [vmem:[#allocation2 + $0x250] sm:$0xff] %v689
        %706 = vst [vmem:[#allocation2 + $0x298] sm:$0xff] %v690
        %707 = vst [vmem:[#allocation2 + $0x2e0] sm:$0xff] %v691
        %708 = vst [vmem:[#allocation2 + $0x328] sm:$0xff] %v692
        %709 = vst [vmem:[#allocation2 + $0x370] sm:$0xff] %v693
        %710 = vst [vmem:[#allocation2 + $0x3b8] sm:$0xff] %v694
        %711 = vst [vmem:[#allocation2 + $0x400] sm:$0xff] %v695
        %712 = vst [vmem:[#allocation2 + $0x448] sm:$0xff] %v696
        %v713 = vpack.c.bf16 %v338, %v337
        %714 = vst [vmem:[#allocation2 + $0x18] sm:$0xff] %v344
        %715 = vst [vmem:[#allocation2 + $0x60] sm:$0xff] %v345
        %716 = vst [vmem:[#allocation2 + $0xa8] sm:$0xff] %v346
        %717 = vst [vmem:[#allocation2 + $0xf0] sm:$0xff] %v347
        %718 = vst [vmem:[#allocation2 + $0x138] sm:$0xff] %v348
        %719 = vst [vmem:[#allocation2 + $0x180] sm:$0xff] %v349
        %720 = vst [vmem:[#allocation2 + $0x1c8] sm:$0xff] %v350
        %721 = vst [vmem:[#allocation2 + $0x210] sm:$0xff] %v351
        %722 = vst [vmem:[#allocation2 + $0x258] sm:$0xff] %v352
        %723 = vst [vmem:[#allocation2 + $0x2a0] sm:$0xff] %v353
        %724 = vst [vmem:[#allocation2 + $0x2e8] sm:$0xff] %v354
        %725 = vst [vmem:[#allocation2 + $0x330] sm:$0xff] %v355
        %726 = vst [vmem:[#allocation2 + $0x378] sm:$0xff] %v356
        %727 = vst [vmem:[#allocation2 + $0x3c0] sm:$0xff] %v357
        %728 = vst [vmem:[#allocation2 + $0x408] sm:$0xff] %v358
        %729 = vst [vmem:[#allocation2 + $0x450] sm:$0xff] %v713
        %v733 = vrot.slane %v337, 1
        %v734 = vrot.slane %v338, 1
        %v735 = vsel %vm423, %v733, %v734
        %v736 = vrot.slane %v339, 1
        %v737 = vsel %vm423, %v734, %v736
        %v740 = vpack.c.bf16 %v737, %v735
        %741 = vst [vmem:[#allocation2 + $0x20] sm:$0xff] %v537
        %742 = vst [vmem:[#allocation2 + $0x68] sm:$0xff] %v538
        %743 = vst [vmem:[#allocation2 + $0xb0] sm:$0xff] %v539
        %744 = vst [vmem:[#allocation2 + $0xf8] sm:$0xff] %v540
        %745 = vst [vmem:[#allocation2 + $0x140] sm:$0xff] %v541
        %746 = vst [vmem:[#allocation2 + $0x188] sm:$0xff] %v542
        %747 = vst [vmem:[#allocation2 + $0x1d0] sm:$0xff] %v543
        %748 = vst [vmem:[#allocation2 + $0x218] sm:$0xff] %v544
        %749 = vst [vmem:[#allocation2 + $0x260] sm:$0xff] %v545
        %750 = vst [vmem:[#allocation2 + $0x2a8] sm:$0xff] %v546
        %751 = vst [vmem:[#allocation2 + $0x2f0] sm:$0xff] %v547
        %752 = vst [vmem:[#allocation2 + $0x338] sm:$0xff] %v548
        %753 = vst [vmem:[#allocation2 + $0x380] sm:$0xff] %v549
        %754 = vst [vmem:[#allocation2 + $0x3c8] sm:$0xff] %v550
        %755 = vst [vmem:[#allocation2 + $0x410] sm:$0xff] %v551
        %756 = vst [vmem:[#allocation2 + $0x458] sm:$0xff] %v740
        %v757 = vrot.slane %v337, 2
        %v758 = vrot.slane %v338, 2
        %v759 = vsel %vm568, %v757, %v758
        %v760 = vrot.slane %v339, 2
        %v761 = vsel %vm568, %v758, %v760
        %v764 = vpack.c.bf16 %v761, %v759
        %765 = vst [vmem:[#allocation2 + $0x28] sm:$0xff] %v682
        %766 = vst [vmem:[#allocation2 + $0x70] sm:$0xff] %v683
        %767 = vst [vmem:[#allocation2 + $0xb8] sm:$0xff] %v684
        %768 = vst [vmem:[#allocation2 + $0x100] sm:$0xff] %v685
        %769 = vst [vmem:[#allocation2 + $0x148] sm:$0xff] %v686
        %770 = vst [vmem:[#allocation2 + $0x190] sm:$0xff] %v687
        %771 = vst [vmem:[#allocation2 + $0x1d8] sm:$0xff] %v688
        %772 = vst [vmem:[#allocation2 + $0x220] sm:$0xff] %v689
        %773 = vst [vmem:[#allocation2 + $0x268] sm:$0xff] %v690
        %774 = vst [vmem:[#allocation2 + $0x2b0] sm:$0xff] %v691
        %775 = vst [vmem:[#allocation2 + $0x2f8] sm:$0xff] %v692
        %776 = vst [vmem:[#allocation2 + $0x340] sm:$0xff] %v693
        %777 = vst [vmem:[#allocation2 + $0x388] sm:$0xff] %v694
        %778 = vst [vmem:[#allocation2 + $0x3d0] sm:$0xff] %v695
        %779 = vst [vmem:[#allocation2 + $0x418] sm:$0xff] %v696
        %780 = vst [vmem:[#allocation2 + $0x460] sm:$0xff] %v764
        %v781 = vpack.c.bf16 %v341, %v340
        %782 = vst [vmem:[#allocation2 + $0x30] sm:$0xff] %v345
        %783 = vst [vmem:[#allocation2 + $0x78] sm:$0xff] %v346
        %784 = vst [vmem:[#allocation2 + $0xc0] sm:$0xff] %v347
        %785 = vst [vmem:[#allocation2 + $0x108] sm:$0xff] %v348
        %786 = vst [vmem:[#allocation2 + $0x150] sm:$0xff] %v349
        %787 = vst [vmem:[#allocation2 + $0x198] sm:$0xff] %v350
        %788 = vst [vmem:[#allocation2 + $0x1e0] sm:$0xff] %v351
        %789 = vst [vmem:[#allocation2 + $0x228] sm:$0xff] %v352
        %790 = vst [vmem:[#allocation2 + $0x270] sm:$0xff] %v353
        %791 = vst [vmem:[#allocation2 + $0x2b8] sm:$0xff] %v354
        %792 = vst [vmem:[#allocation2 + $0x300] sm:$0xff] %v355
        %793 = vst [vmem:[#allocation2 + $0x348] sm:$0xff] %v356
        %794 = vst [vmem:[#allocation2 + $0x390] sm:$0xff] %v357
        %795 = vst [vmem:[#allocation2 + $0x3d8] sm:$0xff] %v358
        %796 = vst [vmem:[#allocation2 + $0x420] sm:$0xff] %v713
        %797 = vst [vmem:[#allocation2 + $0x468] sm:$0xff] %v781
        %v801 = vrot.slane %v340, 1
        %v802 = vrot.slane %v341, 1
        %v803 = vsel %vm423, %v801, %v802
        %v804 = vrot.slane %v342, 1
        %v805 = vsel %vm423, %v802, %v804
        %v808 = vpack.c.bf16 %v805, %v803
        %809 = vst [vmem:[#allocation2 + $0x38] sm:$0xff] %v538
        %810 = vst [vmem:[#allocation2 + $0x80] sm:$0xff] %v539
        %811 = vst [vmem:[#allocation2 + $0xc8] sm:$0xff] %v540
        %812 = vst [vmem:[#allocation2 + $0x110] sm:$0xff] %v541
        %813 = vst [vmem:[#allocation2 + $0x158] sm:$0xff] %v542
        %814 = vst [vmem:[#allocation2 + $0x1a0] sm:$0xff] %v543
        %815 = vst [vmem:[#allocation2 + $0x1e8] sm:$0xff] %v544
        %816 = vst [vmem:[#allocation2 + $0x230] sm:$0xff] %v545
        %817 = vst [vmem:[#allocation2 + $0x278] sm:$0xff] %v546
        %818 = vst [vmem:[#allocation2 + $0x2c0] sm:$0xff] %v547
        %819 = vst [vmem:[#allocation2 + $0x308] sm:$0xff] %v548
        %820 = vst [vmem:[#allocation2 + $0x350] sm:$0xff] %v549
        %821 = vst [vmem:[#allocation2 + $0x398] sm:$0xff] %v550
        %822 = vst [vmem:[#allocation2 + $0x3e0] sm:$0xff] %v551
        %823 = vst [vmem:[#allocation2 + $0x428] sm:$0xff] %v740
        %824 = vst [vmem:[#allocation2 + $0x470] sm:$0xff] %v808
        %v825 = vrot.slane %v340, 2
        %v826 = vrot.slane %v341, 2
        %v827 = vsel %vm568, %v825, %v826
        %v828 = vrot.slane %v342, 2
        %v829 = vsel %vm568, %v826, %v828
        %v832 = vpack.c.bf16 %v829, %v827
        %833 = vst [vmem:[#allocation2 + $0x40] sm:$0xff] %v683
        %834 = vst [vmem:[#allocation2 + $0x88] sm:$0xff] %v684
        %835 = vst [vmem:[#allocation2 + $0xd0] sm:$0xff] %v685
        %836 = vst [vmem:[#allocation2 + $0x118] sm:$0xff] %v686
        %837 = vst [vmem:[#allocation2 + $0x160] sm:$0xff] %v687
        %838 = vst [vmem:[#allocation2 + $0x1a8] sm:$0xff] %v688
        %839 = vst [vmem:[#allocation2 + $0x1f0] sm:$0xff] %v689
        %840 = vst [vmem:[#allocation2 + $0x238] sm:$0xff] %v690
        %841 = vst [vmem:[#allocation2 + $0x280] sm:$0xff] %v691
        %842 = vst [vmem:[#allocation2 + $0x2c8] sm:$0xff] %v692
        %843 = vst [vmem:[#allocation2 + $0x310] sm:$0xff] %v693
        %844 = vst [vmem:[#allocation2 + $0x358] sm:$0xff] %v694
        %845 = vst [vmem:[#allocation2 + $0x3a0] sm:$0xff] %v695
        %846 = vst [vmem:[#allocation2 + $0x3e8] sm:$0xff] %v696
        %847 = vst [vmem:[#allocation2 + $0x430] sm:$0xff] %v764
        %848 = vst [vmem:[#allocation2 + $0x478] sm:$0xff] %v832
        %v849 = vld [vmem:[#allocation2] sm:$0xff]
        %v850 = vld [vmem:[#allocation2 + $0x8] sm:$0xff]
        %v851 = vld [vmem:[#allocation2 + $0x10] sm:$0xff]
        %v852 = vld [vmem:[#allocation2 + $0x18] sm:$0xff]
        %v853 = vld [vmem:[#allocation2 + $0x20] sm:$0xff]
        %v854 = vld [vmem:[#allocation2 + $0x28] sm:$0xff]
        %v855 = vld [vmem:[#allocation2 + $0x30] sm:$0xff]
        %v856 = vld [vmem:[#allocation2 + $0x38] sm:$0xff]
        %v857 = vld [vmem:[#allocation2 + $0x40] sm:$0xff]
        %v858 = vld [vmem:[#allocation2 + $0x48] sm:$0xff]
        %v859 = vld [vmem:[#allocation2 + $0x50] sm:$0xff]
        %v860 = vld [vmem:[#allocation2 + $0x58] sm:$0xff]
        %v861 = vld [vmem:[#allocation2 + $0x60] sm:$0xff]
        %v862 = vld [vmem:[#allocation2 + $0x68] sm:$0xff]
        %v863 = vld [vmem:[#allocation2 + $0x70] sm:$0xff]
        %v864 = vld [vmem:[#allocation2 + $0x78] sm:$0xff]
        %v865 = vld [vmem:[#allocation2 + $0x80] sm:$0xff]
        %v866 = vld [vmem:[#allocation2 + $0x88] sm:$0xff]
        %v867 = vld [vmem:[#allocation2 + $0x90] sm:$0xff]
        %v868 = vld [vmem:[#allocation2 + $0x98] sm:$0xff]
        %v869 = vld [vmem:[#allocation2 + $0xa0] sm:$0xff]
        %v870 = vld [vmem:[#allocation2 + $0xa8] sm:$0xff]
        %v871 = vld [vmem:[#allocation2 + $0xb0] sm:$0xff]
        %v872 = vld [vmem:[#allocation2 + $0xb8] sm:$0xff]
        %v873 = vld [vmem:[#allocation2 + $0xc0] sm:$0xff]
        %v874 = vld [vmem:[#allocation2 + $0xc8] sm:$0xff]
        %v875 = vld [vmem:[#allocation2 + $0xd0] sm:$0xff]
        %v876 = vld [vmem:[#allocation2 + $0xd8] sm:$0xff]
        %v877 = vld [vmem:[#allocation2 + $0xe0] sm:$0xff]
        %v878 = vld [vmem:[#allocation2 + $0xe8] sm:$0xff]
        %v879 = vld [vmem:[#allocation2 + $0xf0] sm:$0xff]
        %v880 = vld [vmem:[#allocation2 + $0xf8] sm:$0xff]
        %v881 = vld [vmem:[#allocation2 + $0x100] sm:$0xff]
        %v882 = vld [vmem:[#allocation2 + $0x108] sm:$0xff]
        %v883 = vld [vmem:[#allocation2 + $0x110] sm:$0xff]
        %v884 = vld [vmem:[#allocation2 + $0x118] sm:$0xff]
        %v885 = vld [vmem:[#allocation2 + $0x120] sm:$0xff]
        %v886 = vld [vmem:[#allocation2 + $0x128] sm:$0xff]
        %v887 = vld [vmem:[#allocation2 + $0x130] sm:$0xff]
        %v888 = vld [vmem:[#allocation2 + $0x138] sm:$0xff]
        %v889 = vld [vmem:[#allocation2 + $0x140] sm:$0xff]
        %v890 = vld [vmem:[#allocation2 + $0x148] sm:$0xff]
        %v891 = vld [vmem:[#allocation2 + $0x150] sm:$0xff]
        %v892 = vld [vmem:[#allocation2 + $0x158] sm:$0xff]
        %v893 = vld [vmem:[#allocation2 + $0x160] sm:$0xff]
        %v894 = vld [vmem:[#allocation2 + $0x168] sm:$0xff]
        %v895 = vld [vmem:[#allocation2 + $0x170] sm:$0xff]
        %v896 = vld [vmem:[#allocation2 + $0x178] sm:$0xff]
        %v897 = vld [vmem:[#allocation2 + $0x180] sm:$0xff]
        %v898 = vld [vmem:[#allocation2 + $0x188] sm:$0xff]
        %v899 = vld [vmem:[#allocation2 + $0x190] sm:$0xff]
        %v900 = vld [vmem:[#allocation2 + $0x198] sm:$0xff]
        %v901 = vld [vmem:[#allocation2 + $0x1a0] sm:$0xff]
        %v902 = vld [vmem:[#allocation2 + $0x1a8] sm:$0xff]
        %v903 = vld [vmem:[#allocation2 + $0x1b0] sm:$0xff]
        %v904 = vld [vmem:[#allocation2 + $0x1b8] sm:$0xff]
        %v905 = vld [vmem:[#allocation2 + $0x1c0] sm:$0xff]
        %v906 = vld [vmem:[#allocation2 + $0x1c8] sm:$0xff]
        %v907 = vld [vmem:[#allocation2 + $0x1d0] sm:$0xff]
        %v908 = vld [vmem:[#allocation2 + $0x1d8] sm:$0xff]
        %v909 = vld [vmem:[#allocation2 + $0x1e0] sm:$0xff]
        %v910 = vld [vmem:[#allocation2 + $0x1e8] sm:$0xff]
        %v911 = vld [vmem:[#allocation2 + $0x1f0] sm:$0xff]
        %v912 = vld [vmem:[#allocation2 + $0x1f8] sm:$0xff]
        %v913 = vld [vmem:[#allocation2 + $0x200] sm:$0xff]
        %v914 = vld [vmem:[#allocation2 + $0x208] sm:$0xff]
        %v915 = vld [vmem:[#allocation2 + $0x210] sm:$0xff]
        %v916 = vld [vmem:[#allocation2 + $0x218] sm:$0xff]
        %v917 = vld [vmem:[#allocation2 + $0x220] sm:$0xff]
        %v918 = vld [vmem:[#allocation2 + $0x228] sm:$0xff]
        %v919 = vld [vmem:[#allocation2 + $0x230] sm:$0xff]
        %v920 = vld [vmem:[#allocation2 + $0x238] sm:$0xff]
        %v921 = vld [vmem:[#allocation2 + $0x240] sm:$0xff]
        %v922 = vld [vmem:[#allocation2 + $0x248] sm:$0xff]
        %v923 = vld [vmem:[#allocation2 + $0x250] sm:$0xff]
        %v924 = vld [vmem:[#allocation2 + $0x258] sm:$0xff]
        %v925 = vld [vmem:[#allocation2 + $0x260] sm:$0xff]
        %v926 = vld [vmem:[#allocation2 + $0x268] sm:$0xff]
        %v927 = vld [vmem:[#allocation2 + $0x270] sm:$0xff]
        %v928 = vld [vmem:[#allocation2 + $0x278] sm:$0xff]
        %v929 = vld [vmem:[#allocation2 + $0x280] sm:$0xff]
        %v930 = vld [vmem:[#allocation2 + $0x288] sm:$0xff]
        %v931 = vld [vmem:[#allocation2 + $0x290] sm:$0xff]
        %v932 = vld [vmem:[#allocation2 + $0x298] sm:$0xff]
        %v933 = vld [vmem:[#allocation2 + $0x2a0] sm:$0xff]
        %v934 = vld [vmem:[#allocation2 + $0x2a8] sm:$0xff]
        %v935 = vld [vmem:[#allocation2 + $0x2b0] sm:$0xff]
        %v936 = vld [vmem:[#allocation2 + $0x2b8] sm:$0xff]
        %v937 = vld [vmem:[#allocation2 + $0x2c0] sm:$0xff]
        %v938 = vld [vmem:[#allocation2 + $0x2c8] sm:$0xff]
        %v939 = vld [vmem:[#allocation2 + $0x2d0] sm:$0xff]
        %v940 = vld [vmem:[#allocation2 + $0x2d8] sm:$0xff]
        %v941 = vld [vmem:[#allocation2 + $0x2e0] sm:$0xff]
        %v942 = vld [vmem:[#allocation2 + $0x2e8] sm:$0xff]
        %v943 = vld [vmem:[#allocation2 + $0x2f0] sm:$0xff]
        %v944 = vld [vmem:[#allocation2 + $0x2f8] sm:$0xff]
        %v945 = vld [vmem:[#allocation2 + $0x300] sm:$0xff]
        %v946 = vld [vmem:[#allocation2 + $0x308] sm:$0xff]
        %v947 = vld [vmem:[#allocation2 + $0x310] sm:$0xff]
        %v948 = vld [vmem:[#allocation2 + $0x318] sm:$0xff]
        %v949 = vld [vmem:[#allocation2 + $0x320] sm:$0xff]
        %v950 = vld [vmem:[#allocation2 + $0x328] sm:$0xff]
        %v951 = vld [vmem:[#allocation2 + $0x330] sm:$0xff]
        %v952 = vld [vmem:[#allocation2 + $0x338] sm:$0xff]
        %v953 = vld [vmem:[#allocation2 + $0x340] sm:$0xff]
        %v954 = vld [vmem:[#allocation2 + $0x348] sm:$0xff]
        %v955 = vld [vmem:[#allocation2 + $0x350] sm:$0xff]
        %v956 = vld [vmem:[#allocation2 + $0x358] sm:$0xff]
        %v957 = vld [vmem:[#allocation2 + $0x360] sm:$0xff]
        %v958 = vld [vmem:[#allocation2 + $0x368] sm:$0xff]
        %v959 = vld [vmem:[#allocation2 + $0x370] sm:$0xff]
        %v960 = vld [vmem:[#allocation2 + $0x378] sm:$0xff]
        %v961 = vld [vmem:[#allocation2 + $0x380] sm:$0xff]
        %v962 = vld [vmem:[#allocation2 + $0x388] sm:$0xff]
        %v963 = vld [vmem:[#allocation2 + $0x390] sm:$0xff]
        %v964 = vld [vmem:[#allocation2 + $0x398] sm:$0xff]
        %v965 = vld [vmem:[#allocation2 + $0x3a0] sm:$0xff]
        %v966 = vld [vmem:[#allocation2 + $0x3a8] sm:$0xff]
        %v967 = vld [vmem:[#allocation2 + $0x3b0] sm:$0xff]
        %v968 = vld [vmem:[#allocation2 + $0x3b8] sm:$0xff]
        %v969 = vld [vmem:[#allocation2 + $0x3c0] sm:$0xff]
        %v970 = vld [vmem:[#allocation2 + $0x3c8] sm:$0xff]
        %v971 = vld [vmem:[#allocation2 + $0x3d0] sm:$0xff]
        %v972 = vld [vmem:[#allocation2 + $0x3d8] sm:$0xff]
        %v973 = vld [vmem:[#allocation2 + $0x3e0] sm:$0xff]
        %v974 = vld [vmem:[#allocation2 + $0x3e8] sm:$0xff]
        %v975 = vld [vmem:[#allocation2 + $0x3f0] sm:$0xff]
        %v976 = vld [vmem:[#allocation2 + $0x3f8] sm:$0xff]
        %v977 = vld [vmem:[#allocation2 + $0x400] sm:$0xff]
        %v978 = vld [vmem:[#allocation2 + $0x408] sm:$0xff]
        %v979 = vld [vmem:[#allocation2 + $0x410] sm:$0xff]
        %v980 = vld [vmem:[#allocation2 + $0x418] sm:$0xff]
        %v981 = vld [vmem:[#allocation2 + $0x420] sm:$0xff]
        %v982 = vld [vmem:[#allocation2 + $0x428] sm:$0xff]
        %v983 = vld [vmem:[#allocation2 + $0x430] sm:$0xff]
        %v984 = vld [vmem:[#allocation2 + $0x438] sm:$0xff]
        %v985 = vld [vmem:[#allocation2 + $0x440] sm:$0xff]
        %v986 = vld [vmem:[#allocation2 + $0x448] sm:$0xff]
        %v987 = vld [vmem:[#allocation2 + $0x450] sm:$0xff]
        %v988 = vld [vmem:[#allocation2 + $0x458] sm:$0xff]
        %v989 = vld [vmem:[#allocation2 + $0x460] sm:$0xff]
        %v990 = vld [vmem:[#allocation2 + $0x468] sm:$0xff]
        %v991 = vld [vmem:[#allocation2 + $0x470] sm:$0xff]
        %v992 = vld [vmem:[#allocation2 + $0x478] sm:$0xff]
        %v993 = vld [vmem:[%s1] sm:$0xf]
        %v994 = vld [vmem:[%s1 + $0x4] sm:$0xf]
        %v995 = vld [vmem:[%s1 + $0x8] sm:$0xf]
        %v996 = vld [vmem:[%s1 + $0xc] sm:$0xf]
        %v997 = vld [vmem:[%s1 + $0x10] sm:$0xf]
        %v998 = vld [vmem:[%s1 + $0x14] sm:$0xf]
        %v999 = vld [vmem:[%s1 + $0x18] sm:$0xf]
        %v1000 = vld [vmem:[%s1 + $0x1c] sm:$0xf]
        %v1001 = vld [vmem:[%s1 + $0x20] sm:$0xf]
        %v1002 = vld [vmem:[%s1 + $0x24] sm:$0xf]
        %v1003 = vld [vmem:[%s1 + $0x28] sm:$0xf]
        %v1004 = vld [vmem:[%s1 + $0x2c] sm:$0xf]
        %v1005 = vld [vmem:[%s1 + $0x30] sm:$0xf]
        %v1006 = vld [vmem:[%s1 + $0x34] sm:$0xf]
        %v1007 = vld [vmem:[%s1 + $0x38] sm:$0xf]
        %v1008 = vld [vmem:[%s1 + $0x3c] sm:$0xf]
        %v1009 = vld [vmem:[%s1 + $0x40] sm:$0xf]
        %v1010 = vld [vmem:[%s1 + $0x44] sm:$0xf]
        %v1011 = vld [vmem:[%s1 + $0x48] sm:$0xf]
        %v1012 = vld [vmem:[%s1 + $0x4c] sm:$0xf]
        %v1013 = vld [vmem:[%s1 + $0x50] sm:$0xf]
        %v1014 = vld [vmem:[%s1 + $0x54] sm:$0xf]
        %v1015 = vld [vmem:[%s1 + $0x58] sm:$0xf]
        %v1016 = vld [vmem:[%s1 + $0x5c] sm:$0xf]
        %v1017 = vld [vmem:[%s1 + $0x60] sm:$0xf]
        %v1018 = vld [vmem:[%s1 + $0x64] sm:$0xf]
        %v1019 = vld [vmem:[%s1 + $0x68] sm:$0xf]
        %v1020 = vld [vmem:[%s1 + $0x6c] sm:$0xf]
        %v1021 = vld [vmem:[%s1 + $0x70] sm:$0xf]
        %v1022 = vld [vmem:[%s1 + $0x74] sm:$0xf]
        %v1023 = vld [vmem:[%s1 + $0x78] sm:$0xf]
        %v1024 = vld [vmem:[%s1 + $0x7c] sm:$0xf]
        %v1025 = vld [vmem:[%s1 + $0x80] sm:$0xf]
        %v1026 = vld [vmem:[%s1 + $0x84] sm:$0xf]
        %v1027 = vld [vmem:[%s1 + $0x88] sm:$0xf]
        %v1028 = vld [vmem:[%s1 + $0x8c] sm:$0xf]
        %v1029 = vld [vmem:[%s1 + $0x90] sm:$0xf]
        %v1030 = vld [vmem:[%s1 + $0x94] sm:$0xf]
        %v1031 = vld [vmem:[%s1 + $0x98] sm:$0xf]
        %v1032 = vld [vmem:[%s1 + $0x9c] sm:$0xf]
        %v1033 = vld [vmem:[%s1 + $0xa0] sm:$0xf]
        %v1034 = vld [vmem:[%s1 + $0xa4] sm:$0xf]
        %v1035 = vld [vmem:[%s1 + $0xa8] sm:$0xf]
        %v1036 = vld [vmem:[%s1 + $0xac] sm:$0xf]
        %v1037 = vld [vmem:[%s1 + $0xb0] sm:$0xf]
        %v1038 = vld [vmem:[%s1 + $0xb4] sm:$0xf]
        %v1039 = vld [vmem:[%s1 + $0xb8] sm:$0xf]
        %v1040 = vld [vmem:[%s1 + $0xbc] sm:$0xf]
        %v1041 = vld [vmem:[%s1 + $0xc0] sm:$0xf]
        %v1042 = vld [vmem:[%s1 + $0xc4] sm:$0xf]
        %v1043 = vld [vmem:[%s1 + $0xc8] sm:$0xf]
        %v1044 = vld [vmem:[%s1 + $0xcc] sm:$0xf]
        %v1045 = vld [vmem:[%s1 + $0xd0] sm:$0xf]
        %v1046 = vld [vmem:[%s1 + $0xd4] sm:$0xf]
        %v1047 = vld [vmem:[%s1 + $0xd8] sm:$0xf]
        %v1048 = vld [vmem:[%s1 + $0xdc] sm:$0xf]
        %v1049 = vld [vmem:[%s1 + $0xe0] sm:$0xf]
        %v1050 = vld [vmem:[%s1 + $0xe4] sm:$0xf]
        %v1051 = vld [vmem:[%s1 + $0xe8] sm:$0xf]
        %v1052 = vld [vmem:[%s1 + $0xec] sm:$0xf]
        %v1053 = vld [vmem:[%s1 + $0xf0] sm:$0xf]
        %v1054 = vld [vmem:[%s1 + $0xf4] sm:$0xf]
        %v1055 = vld [vmem:[%s1 + $0xf8] sm:$0xf]
        %v1056 = vld [vmem:[%s1 + $0xfc] sm:$0xf]
        %v1057 = vld [vmem:[%s1 + $0x100] sm:$0xf]
        %v1058 = vld [vmem:[%s1 + $0x104] sm:$0xf]
        %v1059 = vld [vmem:[%s1 + $0x108] sm:$0xf]
        %v1060 = vld [vmem:[%s1 + $0x10c] sm:$0xf]
        %v1061 = vld [vmem:[%s1 + $0x110] sm:$0xf]
        %v1062 = vld [vmem:[%s1 + $0x114] sm:$0xf]
        %v1063 = vld [vmem:[%s1 + $0x118] sm:$0xf]
        %v1064 = vld [vmem:[%s1 + $0x11c] sm:$0xf]
        %v1065 = vld [vmem:[%s1 + $0x120] sm:$0xf]
        %v1066 = vld [vmem:[%s1 + $0x124] sm:$0xf]
        %v1067 = vld [vmem:[%s1 + $0x128] sm:$0xf]
        %v1068 = vld [vmem:[%s1 + $0x12c] sm:$0xf]
        %v1069 = vld [vmem:[%s1 + $0x130] sm:$0xf]
        %v1070 = vld [vmem:[%s1 + $0x134] sm:$0xf]
        %v1071 = vld [vmem:[%s1 + $0x138] sm:$0xf]
        %v1072 = vld [vmem:[%s1 + $0x13c] sm:$0xf]
        %v1073 = vld [vmem:[%s1 + $0x140] sm:$0xf]
        %v1074 = vld [vmem:[%s1 + $0x144] sm:$0xf]
        %v1075 = vld [vmem:[%s1 + $0x148] sm:$0xf]
        %v1076 = vld [vmem:[%s1 + $0x14c] sm:$0xf]
        %v1077 = vld [vmem:[%s1 + $0x150] sm:$0xf]
        %v1078 = vld [vmem:[%s1 + $0x154] sm:$0xf]
        %v1079 = vld [vmem:[%s1 + $0x158] sm:$0xf]
        %v1080 = vld [vmem:[%s1 + $0x15c] sm:$0xf]
        %v1081 = vld [vmem:[%s1 + $0x160] sm:$0xf]
        %v1082 = vld [vmem:[%s1 + $0x164] sm:$0xf]
        %v1083 = vld [vmem:[%s1 + $0x168] sm:$0xf]
        %v1084 = vld [vmem:[%s1 + $0x16c] sm:$0xf]
        %v1085 = vld [vmem:[%s1 + $0x170] sm:$0xf]
        %v1086 = vld [vmem:[%s1 + $0x174] sm:$0xf]
        %v1087 = vld [vmem:[%s1 + $0x178] sm:$0xf]
        %v1088 = vld [vmem:[%s1 + $0x17c] sm:$0xf]
        %v1089 = vld [vmem:[%s1 + $0x180] sm:$0xf]
        %v1090 = vld [vmem:[%s1 + $0x184] sm:$0xf]
        %v1091 = vld [vmem:[%s1 + $0x188] sm:$0xf]
        %v1092 = vld [vmem:[%s1 + $0x18c] sm:$0xf]
        %v1093 = vld [vmem:[%s1 + $0x190] sm:$0xf]
        %v1094 = vld [vmem:[%s1 + $0x194] sm:$0xf]
        %v1095 = vld [vmem:[%s1 + $0x198] sm:$0xf]
        %v1096 = vld [vmem:[%s1 + $0x19c] sm:$0xf]
        %v1097 = vld [vmem:[%s1 + $0x1a0] sm:$0xf]
        %v1098 = vld [vmem:[%s1 + $0x1a4] sm:$0xf]
        %v1099 = vld [vmem:[%s1 + $0x1a8] sm:$0xf]
        %v1100 = vld [vmem:[%s1 + $0x1ac] sm:$0xf]
        %v1101 = vld [vmem:[%s1 + $0x1b0] sm:$0xf]
        %v1102 = vld [vmem:[%s1 + $0x1b4] sm:$0xf]
        %v1103 = vld [vmem:[%s1 + $0x1b8] sm:$0xf]
        %v1104 = vld [vmem:[%s1 + $0x1bc] sm:$0xf]
        %v1105 = vld [vmem:[%s1 + $0x1c0] sm:$0xf]
        %v1106 = vld [vmem:[%s1 + $0x1c4] sm:$0xf]
        %v1107 = vld [vmem:[%s1 + $0x1c8] sm:$0xf]
        %v1108 = vld [vmem:[%s1 + $0x1cc] sm:$0xf]
        %v1109 = vld [vmem:[%s1 + $0x1d0] sm:$0xf]
        %v1110 = vld [vmem:[%s1 + $0x1d4] sm:$0xf]
        %v1111 = vld [vmem:[%s1 + $0x1d8] sm:$0xf]
        %v1112 = vld [vmem:[%s1 + $0x1dc] sm:$0xf]
        %v1113 = vld [vmem:[%s1 + $0x1e0] sm:$0xf]
        %v1114 = vld [vmem:[%s1 + $0x1e4] sm:$0xf]
        %v1115 = vld [vmem:[%s1 + $0x1e8] sm:$0xf]
        %v1116 = vld [vmem:[%s1 + $0x1ec] sm:$0xf]
        %v1117 = vld [vmem:[%s1 + $0x1f0] sm:$0xf]
        %v1118 = vld [vmem:[%s1 + $0x1f4] sm:$0xf]
        %v1119 = vld [vmem:[%s1 + $0x1f8] sm:$0xf]
        %v1120 = vld [vmem:[%s1 + $0x1fc] sm:$0xf]
        %v1121 = vld [vmem:[%s1 + $0x200] sm:$0xf]
        %v1122 = vld [vmem:[%s1 + $0x204] sm:$0xf]
        %v1123 = vld [vmem:[%s1 + $0x208] sm:$0xf]
        %v1124 = vld [vmem:[%s1 + $0x20c] sm:$0xf]
        %v1125 = vld [vmem:[%s1 + $0x210] sm:$0xf]
        %v1126 = vld [vmem:[%s1 + $0x214] sm:$0xf]
        %v1127 = vld [vmem:[%s1 + $0x218] sm:$0xf]
        %v1128 = vld [vmem:[%s1 + $0x21c] sm:$0xf]
        %v1129 = vld [vmem:[%s1 + $0x220] sm:$0xf]
        %v1130 = vld [vmem:[%s1 + $0x224] sm:$0xf]
        %v1131 = vld [vmem:[%s1 + $0x228] sm:$0xf]
        %v1132 = vld [vmem:[%s1 + $0x22c] sm:$0xf]
        %v1133 = vld [vmem:[%s1 + $0x230] sm:$0xf]
        %v1134 = vld [vmem:[%s1 + $0x234] sm:$0xf]
        %v1135 = vld [vmem:[%s1 + $0x238] sm:$0xf]
        %v1136 = vld [vmem:[%s1 + $0x23c] sm:$0xf]
        %v1281 = vunpack.c.l.b16 %v993
        %v1282 = vunpack.c.l.b16 %v994
        %v1283 = vunpack.c.l.b16 %v995
        %v1284 = vunpack.c.l.b16 %v996
        %v1285 = vunpack.c.l.b16 %v997
        %v1286 = vunpack.c.l.b16 %v998
        %v1287 = vunpack.c.l.b16 %v999
        %v1288 = vunpack.c.l.b16 %v1000
        %v1289 = vunpack.c.l.b16 %v1001
        %v1290 = vunpack.c.l.b16 %v1002
        %v1291 = vunpack.c.l.b16 %v1003
        %v1292 = vunpack.c.l.b16 %v1004
        %v1293 = vunpack.c.l.b16 %v1005
        %v1294 = vunpack.c.l.b16 %v1006
        %v1295 = vunpack.c.l.b16 %v1007
        %v1296 = vunpack.c.l.b16 %v1008
        %v1297 = vunpack.c.l.b16 %v1009
        %v1298 = vunpack.c.l.b16 %v1010
        %v1299 = vunpack.c.l.b16 %v1011
        %v1300 = vunpack.c.l.b16 %v1012
        %v1301 = vunpack.c.l.b16 %v1013
        %v1302 = vunpack.c.l.b16 %v1014
        %v1303 = vunpack.c.l.b16 %v1015
        %v1304 = vunpack.c.l.b16 %v1016
        %v1305 = vunpack.c.l.b16 %v1017
        %v1306 = vunpack.c.l.b16 %v1018
        %v1307 = vunpack.c.l.b16 %v1019
        %v1308 = vunpack.c.l.b16 %v1020
        %v1309 = vunpack.c.l.b16 %v1021
        %v1310 = vunpack.c.l.b16 %v1022
        %v1311 = vunpack.c.l.b16 %v1023
        %v1312 = vunpack.c.l.b16 %v1024
        %v1313 = vunpack.c.l.b16 %v1025
        %v1314 = vunpack.c.l.b16 %v1026
        %v1315 = vunpack.c.l.b16 %v1027
        %v1316 = vunpack.c.l.b16 %v1028
        %v1317 = vunpack.c.l.b16 %v1029
        %v1318 = vunpack.c.l.b16 %v1030
        %v1319 = vunpack.c.l.b16 %v1031
        %v1320 = vunpack.c.l.b16 %v1032
        %v1321 = vunpack.c.l.b16 %v1033
        %v1322 = vunpack.c.l.b16 %v1034
        %v1323 = vunpack.c.l.b16 %v1035
        %v1324 = vunpack.c.l.b16 %v1036
        %v1325 = vunpack.c.l.b16 %v1037
        %v1326 = vunpack.c.l.b16 %v1038
        %v1327 = vunpack.c.l.b16 %v1039
        %v1328 = vunpack.c.l.b16 %v1040
        %v1329 = vunpack.c.l.b16 %v1041
        %v1330 = vunpack.c.l.b16 %v1042
        %v1331 = vunpack.c.l.b16 %v1043
        %v1332 = vunpack.c.l.b16 %v1044
        %v1333 = vunpack.c.l.b16 %v1045
        %v1334 = vunpack.c.l.b16 %v1046
        %v1335 = vunpack.c.l.b16 %v1047
        %v1336 = vunpack.c.l.b16 %v1048
        %v1337 = vunpack.c.l.b16 %v1049
        %v1338 = vunpack.c.l.b16 %v1050
        %v1339 = vunpack.c.l.b16 %v1051
        %v1340 = vunpack.c.l.b16 %v1052
        %v1341 = vunpack.c.l.b16 %v1053
        %v1342 = vunpack.c.l.b16 %v1054
        %v1343 = vunpack.c.l.b16 %v1055
        %v1344 = vunpack.c.l.b16 %v1056
        %v1345 = vunpack.c.l.b16 %v1057
        %v1346 = vunpack.c.l.b16 %v1058
        %v1347 = vunpack.c.l.b16 %v1059
        %v1348 = vunpack.c.l.b16 %v1060
        %v1349 = vunpack.c.l.b16 %v1061
        %v1350 = vunpack.c.l.b16 %v1062
        %v1351 = vunpack.c.l.b16 %v1063
        %v1352 = vunpack.c.l.b16 %v1064
        %v1353 = vunpack.c.l.b16 %v1065
        %v1354 = vunpack.c.l.b16 %v1066
        %v1355 = vunpack.c.l.b16 %v1067
        %v1356 = vunpack.c.l.b16 %v1068
        %v1357 = vunpack.c.l.b16 %v1069
        %v1358 = vunpack.c.l.b16 %v1070
        %v1359 = vunpack.c.l.b16 %v1071
        %v1360 = vunpack.c.l.b16 %v1072
        %v1361 = vunpack.c.l.b16 %v1073
        %v1362 = vunpack.c.l.b16 %v1074
        %v1363 = vunpack.c.l.b16 %v1075
        %v1364 = vunpack.c.l.b16 %v1076
        %v1365 = vunpack.c.l.b16 %v1077
        %v1366 = vunpack.c.l.b16 %v1078
        %v1367 = vunpack.c.l.b16 %v1079
        %v1368 = vunpack.c.l.b16 %v1080
        %v1369 = vunpack.c.l.b16 %v1081
        %v1370 = vunpack.c.l.b16 %v1082
        %v1371 = vunpack.c.l.b16 %v1083
        %v1372 = vunpack.c.l.b16 %v1084
        %v1373 = vunpack.c.l.b16 %v1085
        %v1374 = vunpack.c.l.b16 %v1086
        %v1375 = vunpack.c.l.b16 %v1087
        %v1376 = vunpack.c.l.b16 %v1088
        %v1377 = vunpack.c.l.b16 %v1089
        %v1378 = vunpack.c.l.b16 %v1090
        %v1379 = vunpack.c.l.b16 %v1091
        %v1380 = vunpack.c.l.b16 %v1092
        %v1381 = vunpack.c.l.b16 %v1093
        %v1382 = vunpack.c.l.b16 %v1094
        %v1383 = vunpack.c.l.b16 %v1095
        %v1384 = vunpack.c.l.b16 %v1096
        %v1385 = vunpack.c.l.b16 %v1097
        %v1386 = vunpack.c.l.b16 %v1098
        %v1387 = vunpack.c.l.b16 %v1099
        %v1388 = vunpack.c.l.b16 %v1100
        %v1389 = vunpack.c.l.b16 %v1101
        %v1390 = vunpack.c.l.b16 %v1102
        %v1391 = vunpack.c.l.b16 %v1103
        %v1392 = vunpack.c.l.b16 %v1104
        %v1393 = vunpack.c.l.b16 %v1105
        %v1394 = vunpack.c.l.b16 %v1106
        %v1395 = vunpack.c.l.b16 %v1107
        %v1396 = vunpack.c.l.b16 %v1108
        %v1397 = vunpack.c.l.b16 %v1109
        %v1398 = vunpack.c.l.b16 %v1110
        %v1399 = vunpack.c.l.b16 %v1111
        %v1400 = vunpack.c.l.b16 %v1112
        %v1401 = vunpack.c.l.b16 %v1113
        %v1402 = vunpack.c.l.b16 %v1114
        %v1403 = vunpack.c.l.b16 %v1115
        %v1404 = vunpack.c.l.b16 %v1116
        %v1405 = vunpack.c.l.b16 %v1117
        %v1406 = vunpack.c.l.b16 %v1118
        %v1407 = vunpack.c.l.b16 %v1119
        %v1408 = vunpack.c.l.b16 %v1120
        %v1409 = vunpack.c.l.b16 %v1121
        %v1410 = vunpack.c.l.b16 %v1122
        %v1411 = vunpack.c.l.b16 %v1123
        %v1412 = vunpack.c.l.b16 %v1124
        %v1413 = vunpack.c.l.b16 %v1125
        %v1414 = vunpack.c.l.b16 %v1126
        %v1415 = vunpack.c.l.b16 %v1127
        %v1416 = vunpack.c.l.b16 %v1128
        %v1417 = vunpack.c.l.b16 %v1129
        %v1418 = vunpack.c.l.b16 %v1130
        %v1419 = vunpack.c.l.b16 %v1131
        %v1420 = vunpack.c.l.b16 %v1132
        %v1421 = vunpack.c.l.b16 %v1133
        %v1422 = vunpack.c.l.b16 %v1134
        %v1423 = vunpack.c.l.b16 %v1135
        %v1424 = vunpack.c.l.b16 %v1136
        %v1425 = vpack.c.b16 %v1282, %v1281
        %v1426 = vpack.c.b16 %v1284, %v1283
        %v1427 = vpack.c.b16 %v1286, %v1285
        %v1428 = vpack.c.b16 %v1288, %v1287
        %v1429 = vpack.c.b16 %v1290, %v1289
        %v1430 = vpack.c.b16 %v1292, %v1291
        %v1431 = vpack.c.b16 %v1294, %v1293
        %v1432 = vpack.c.b16 %v1296, %v1295
        %v1433 = vpack.c.b16 %v1298, %v1297
        %v1434 = vpack.c.b16 %v1300, %v1299
        %v1435 = vpack.c.b16 %v1302, %v1301
        %v1436 = vpack.c.b16 %v1304, %v1303
        %v1437 = vpack.c.b16 %v1306, %v1305
        %v1438 = vpack.c.b16 %v1308, %v1307
        %v1439 = vpack.c.b16 %v1310, %v1309
        %v1440 = vpack.c.b16 %v1312, %v1311
        %v1441 = vpack.c.b16 %v1314, %v1313
        %v1442 = vpack.c.b16 %v1316, %v1315
        %v1443 = vpack.c.b16 %v1318, %v1317
        %v1444 = vpack.c.b16 %v1320, %v1319
        %v1445 = vpack.c.b16 %v1322, %v1321
        %v1446 = vpack.c.b16 %v1324, %v1323
        %v1447 = vpack.c.b16 %v1326, %v1325
        %v1448 = vpack.c.b16 %v1328, %v1327
        %v1449 = vpack.c.b16 %v1330, %v1329
        %v1450 = vpack.c.b16 %v1332, %v1331
        %v1451 = vpack.c.b16 %v1334, %v1333
        %v1452 = vpack.c.b16 %v1336, %v1335
        %v1453 = vpack.c.b16 %v1338, %v1337
        %v1454 = vpack.c.b16 %v1340, %v1339
        %v1455 = vpack.c.b16 %v1342, %v1341
        %v1456 = vpack.c.b16 %v1344, %v1343
        %v1457 = vpack.c.b16 %v1346, %v1345
        %v1458 = vpack.c.b16 %v1348, %v1347
        %v1459 = vpack.c.b16 %v1350, %v1349
        %v1460 = vpack.c.b16 %v1352, %v1351
        %v1461 = vpack.c.b16 %v1354, %v1353
        %v1462 = vpack.c.b16 %v1356, %v1355
        %v1463 = vpack.c.b16 %v1358, %v1357
        %v1464 = vpack.c.b16 %v1360, %v1359
        %v1465 = vpack.c.b16 %v1362, %v1361
        %v1466 = vpack.c.b16 %v1364, %v1363
        %v1467 = vpack.c.b16 %v1366, %v1365
        %v1468 = vpack.c.b16 %v1368, %v1367
        %v1469 = vpack.c.b16 %v1370, %v1369
        %v1470 = vpack.c.b16 %v1372, %v1371
        %v1471 = vpack.c.b16 %v1374, %v1373
        %v1472 = vpack.c.b16 %v1376, %v1375
        %v1473 = vpack.c.b16 %v1378, %v1377
        %v1474 = vpack.c.b16 %v1380, %v1379
        %v1475 = vpack.c.b16 %v1382, %v1381
        %v1476 = vpack.c.b16 %v1384, %v1383
        %v1477 = vpack.c.b16 %v1386, %v1385
        %v1478 = vpack.c.b16 %v1388, %v1387
        %v1479 = vpack.c.b16 %v1390, %v1389
        %v1480 = vpack.c.b16 %v1392, %v1391
        %v1481 = vpack.c.b16 %v1394, %v1393
        %v1482 = vpack.c.b16 %v1396, %v1395
        %v1483 = vpack.c.b16 %v1398, %v1397
        %v1484 = vpack.c.b16 %v1400, %v1399
        %v1485 = vpack.c.b16 %v1402, %v1401
        %v1486 = vpack.c.b16 %v1404, %v1403
        %v1487 = vpack.c.b16 %v1406, %v1405
        %v1488 = vpack.c.b16 %v1408, %v1407
        %v1489 = vpack.c.b16 %v1410, %v1409
        %v1490 = vpack.c.b16 %v1412, %v1411
        %v1491 = vpack.c.b16 %v1414, %v1413
        %v1492 = vpack.c.b16 %v1416, %v1415
        %v1493 = vpack.c.b16 %v1418, %v1417
        %v1494 = vpack.c.b16 %v1420, %v1419
        %v1495 = vpack.c.b16 %v1422, %v1421
        %v1496 = vpack.c.b16 %v1424, %v1423
        %1569 = vmatprep.subr.bf16.mxu0 0
        %1570 = vmatpush1.bf16.msra.mxu0 %v1425
        %1571 = vmatprep.subr.bf16.mxu0 0
        %1572 = vmatpush1.bf16.msra.mxu0 %v1426
        %1573 = vmatprep.subr.bf16.mxu0 0
        %1574 = vmatpush1.bf16.msra.mxu0 %v1427
        %1575 = vmatprep.subr.bf16.mxu0 0
        %1576 = vmatpush1.bf16.msra.mxu0 %v1428
        %1577 = vmatprep.subr.bf16.mxu0 0
        %1578 = vmatpush1.bf16.msra.mxu0 %v1429
        %1579 = vmatprep.subr.bf16.mxu0 0
        %1580 = vmatpush1.bf16.msra.mxu0 %v1430
        %1581 = vmatprep.subr.bf16.mxu0 0
        %1582 = vmatpush1.bf16.msra.mxu0 %v1431
        %1583 = vmatprep.subr.bf16.mxu0 0
        %1584 = vmatpush1.bf16.msra.mxu0 %v1432
        %1585 = vmatprep.subr.bf16.mxu0 0
        %1586 = vmatpush1.bf16.msra.mxu0 %v1433
        %1587 = vmatprep.subr.bf16.mxu0 0
        %1588 = vmatpush1.bf16.msra.mxu0 %v1434
        %1589 = vmatprep.subr.bf16.mxu0 0
        %1590 = vmatpush1.bf16.msra.mxu0 %v1435
        %1591 = vmatprep.subr.bf16.mxu0 0
        %1592 = vmatpush1.bf16.msra.mxu0 %v1436
        %1593 = vmatprep.subr.bf16.mxu0 0
        %1594 = vmatpush1.bf16.msra.mxu0 %v1437
        %1595 = vmatprep.subr.bf16.mxu0 0
        %1596 = vmatpush1.bf16.msra.mxu0 %v1438
        %1597 = vmatprep.subr.bf16.mxu0 0
        %1598 = vmatpush1.bf16.msra.mxu0 %v1439
        %1599 = vmatprep.subr.bf16.mxu0 0
        %1600 = vmatpush1.bf16.msra.mxu0 %v1440
        %1601 = vmatprep.mubr.bf16.mxu0 %v850
        %1602 = vmatmul.mubr.bf16.gmra.mrb[0].mxu0 %v849
        %v1603 = vpop.f32.mrb[0].mxu0
        %v1604 = vadd.f32 0.0, %v1603
        %v1605 = vpop.f32.mrb[0].mxu0
        %v1606 = vpop.f32.mrb[0].mxu0
        %v1607 = vadd.f32 0.0, %v1606
        %v1608 = vpop.f32.mrb[0].mxu0
        %1609 = vmatprep.mubr.bf16.mxu0 %v859
        %1610 = vmatmul.mubr.bf16.gmra.mrb[0].mxu0 %v858
        %v1611 = vpop.f32.mrb[0].mxu0
        %v1612 = vadd.f32 0.0, %v1611
        %v1613 = vpop.f32.mrb[0].mxu0
        %v1614 = vpop.f32.mrb[0].mxu0
        %v1615 = vadd.f32 0.0, %v1614
        %v1616 = vpop.f32.mrb[0].mxu0
        %1617 = vmatprep.mubr.bf16.mxu0 %v868
        %1618 = vmatmul.mubr.bf16.gmra.mrb[0].mxu0 %v867
        %v1619 = vpop.f32.mrb[0].mxu0
        %v1620 = vadd.f32 0.0, %v1619
        %v1621 = vpop.f32.mrb[0].mxu0
        %v1622 = vpop.f32.mrb[0].mxu0
        %v1623 = vadd.f32 0.0, %v1622
        %v1624 = vpop.f32.mrb[0].mxu0
        %1625 = vmatprep.mubr.bf16.mxu0 %v877
        %1626 = vmatmul.mubr.bf16.gmra.mrb[0].mxu0 %v876
        %v1627 = vpop.f32.mrb[0].mxu0
        %v1628 = vadd.f32 0.0, %v1627
        %v1629 = vpop.f32.mrb[0].mxu0
        %v1630 = vpop.f32.mrb[0].mxu0
        %v1631 = vadd.f32 0.0, %v1630
        %v1632 = vpop.f32.mrb[0].mxu0
        %1633 = vmatprep.mubr.bf16.mxu0 %v886
        %1634 = vmatmul.mubr.bf16.gmra.mrb[0].mxu0 %v885
        %v1635 = vpop.f32.mrb[0].mxu0
        %v1636 = vadd.f32 0.0, %v1635
        %v1637 = vpop.f32.mrb[0].mxu0
        %v1638 = vpop.f32.mrb[0].mxu0
        %v1639 = vadd.f32 0.0, %v1638
        %v1640 = vpop.f32.mrb[0].mxu0
        %1641 = vmatprep.mubr.bf16.mxu0 %v895
        %1642 = vmatmul.mubr.bf16.gmra.mrb[0].mxu0 %v894
        %v1643 = vpop.f32.mrb[0].mxu0
        %v1644 = vadd.f32 0.0, %v1643
        %v1645 = vpop.f32.mrb[0].mxu0
        %v1646 = vpop.f32.mrb[0].mxu0
        %v1647 = vadd.f32 0.0, %v1646
        %v1648 = vpop.f32.mrb[0].mxu0
        %1649 = vmatprep.mubr.bf16.mxu0 %v904
        %1650 = vmatmul.mubr.bf16.gmra.mrb[0].mxu0 %v903
        %v1651 = vpop.f32.mrb[0].mxu0
        %v1652 = vadd.f32 0.0, %v1651
        %v1653 = vpop.f32.mrb[0].mxu0
        %v1654 = vpop.f32.mrb[0].mxu0
        %v1655 = vadd.f32 0.0, %v1654
        %v1656 = vpop.f32.mrb[0].mxu0
        %1657 = vmatprep.mubr.bf16.mxu0 %v913
        %1658 = vmatmul.mubr.bf16.gmra.mrb[0].mxu0 %v912
        %v1659 = vpop.f32.mrb[0].mxu0
        %v1660 = vadd.f32 0.0, %v1659
        %v1661 = vpop.f32.mrb[0].mxu0
        %v1662 = vpop.f32.mrb[0].mxu0
        %v1663 = vadd.f32 0.0, %v1662
        %v1664 = vpop.f32.mrb[0].mxu0
        %1665 = vmatprep.mubr.bf16.mxu0 %v922
        %1666 = vmatmul.mubr.bf16.gmra.mrb[0].mxu0 %v921
        %v1667 = vpop.f32.mrb[0].mxu0
        %v1668 = vadd.f32 0.0, %v1667
        %v1669 = vpop.f32.mrb[0].mxu0
        %v1670 = vpop.f32.mrb[0].mxu0
        %v1671 = vadd.f32 0.0, %v1670
        %v1672 = vpop.f32.mrb[0].mxu0
        %1673 = vmatprep.mubr.bf16.mxu0 %v931
        %1674 = vmatmul.mubr.bf16.gmra.mrb[0].mxu0 %v930
        %v1675 = vpop.f32.mrb[0].mxu0
        %v1676 = vadd.f32 0.0, %v1675
        %v1677 = vpop.f32.mrb[0].mxu0
        %v1678 = vpop.f32.mrb[0].mxu0
        %v1679 = vadd.f32 0.0, %v1678
        %v1680 = vpop.f32.mrb[0].mxu0
        %1681 = vmatprep.mubr.bf16.mxu0 %v940
        %1682 = vmatmul.mubr.bf16.gmra.mrb[0].mxu0 %v939
        %v1683 = vpop.f32.mrb[0].mxu0
        %v1684 = vadd.f32 0.0, %v1683
        %v1685 = vpop.f32.mrb[0].mxu0
        %v1686 = vpop.f32.mrb[0].mxu0
        %v1687 = vadd.f32 0.0, %v1686
        %v1688 = vpop.f32.mrb[0].mxu0
        %1689 = vmatprep.mubr.bf16.mxu0 %v949
        %1690 = vmatmul.mubr.bf16.gmra.mrb[0].mxu0 %v948
        %v1691 = vpop.f32.mrb[0].mxu0
        %v1692 = vadd.f32 0.0, %v1691
        %v1693 = vpop.f32.mrb[0].mxu0
        %v1694 = vpop.f32.mrb[0].mxu0
        %v1695 = vadd.f32 0.0, %v1694
        %v1696 = vpop.f32.mrb[0].mxu0
        %1697 = vmatprep.mubr.bf16.mxu0 %v958
        %1698 = vmatmul.mubr.bf16.gmra.mrb[0].mxu0 %v957
        %v1699 = vpop.f32.mrb[0].mxu0
        %v1700 = vadd.f32 0.0, %v1699
        %v1701 = vpop.f32.mrb[0].mxu0
        %v1702 = vpop.f32.mrb[0].mxu0
        %v1703 = vadd.f32 0.0, %v1702
        %v1704 = vpop.f32.mrb[0].mxu0
        %1705 = vmatprep.mubr.bf16.mxu0 %v967
        %1706 = vmatmul.mubr.bf16.gmra.mrb[0].mxu0 %v966
        %v1707 = vpop.f32.mrb[0].mxu0
        %v1708 = vadd.f32 0.0, %v1707
        %v1709 = vpop.f32.mrb[0].mxu0
        %v1710 = vpop.f32.mrb[0].mxu0
        %v1711 = vadd.f32 0.0, %v1710
        %v1712 = vpop.f32.mrb[0].mxu0
        %1713 = vmatprep.mubr.bf16.mxu0 %v976
        %1714 = vmatmul.mubr.bf16.gmra.mrb[0].mxu0 %v975
        %v1715 = vpop.f32.mrb[0].mxu0
        %v1716 = vadd.f32 0.0, %v1715
        %v1717 = vpop.f32.mrb[0].mxu0
        %v1718 = vpop.f32.mrb[0].mxu0
        %v1719 = vadd.f32 0.0, %v1718
        %v1720 = vpop.f32.mrb[0].mxu0
        %1721 = vmatprep.mubr.bf16.mxu0 %v985
        %1722 = vmatmul.mubr.bf16.gmra.mrb[0].mxu0 %v984
        %v1723 = vpop.f32.mrb[0].mxu0
        %v1724 = vadd.f32 0.0, %v1723
        %v1725 = vpop.f32.mrb[0].mxu0
        %v1726 = vpop.f32.mrb[0].mxu0
        %v1727 = vadd.f32 0.0, %v1726
        %v1728 = vpop.f32.mrb[0].mxu0
        %1729 = vdwg.mxu0
        %1730 = vmatprep.subr.bf16.mxu0 0
        %1731 = vmatpush1.bf16.msra.mxu0 %v1441
        %1732 = vmatprep.subr.bf16.mxu0 0
        %1733 = vmatpush1.bf16.msra.mxu0 %v1442
        %1734 = vmatprep.subr.bf16.mxu0 0
        %1735 = vmatpush1.bf16.msra.mxu0 %v1443
        %1736 = vmatprep.subr.bf16.mxu0 0
        %1737 = vmatpush1.bf16.msra.mxu0 %v1444
        %1738 = vmatprep.subr.bf16.mxu0 0
        %1739 = vmatpush1.bf16.msra.mxu0 %v1445
        %1740 = vmatprep.subr.bf16.mxu0 0
        %1741 = vmatpush1.bf16.msra.mxu0 %v1446
        %1742 = vmatprep.subr.bf16.mxu0 0
        %1743 = vmatpush1.bf16.msra.mxu0 %v1447
        %1744 = vmatprep.subr.bf16.mxu0 0
        %1745 = vmatpush1.bf16.msra.mxu0 %v1448
        %1746 = vmatprep.subr.bf16.mxu0 0
        %1747 = vmatpush1.bf16.msra.mxu0 %v1449
        %1748 = vmatprep.subr.bf16.mxu0 0
        %1749 = vmatpush1.bf16.msra.mxu0 %v1450
        %1750 = vmatprep.subr.bf16.mxu0 0
        %1751 = vmatpush1.bf16.msra.mxu0 %v1451
        %1752 = vmatprep.subr.bf16.mxu0 0
        %1753 = vmatpush1.bf16.msra.mxu0 %v1452
        %1754 = vmatprep.subr.bf16.mxu0 0
        %1755 = vmatpush1.bf16.msra.mxu0 %v1453
        %1756 = vmatprep.subr.bf16.mxu0 0
        %1757 = vmatpush1.bf16.msra.mxu0 %v1454
        %1758 = vmatprep.subr.bf16.mxu0 0
        %1759 = vmatpush1.bf16.msra.mxu0 %v1455
        %1760 = vmatprep.subr.bf16.mxu0 0
        %1761 = vmatpush1.bf16.msra.mxu0 %v1456
        %1762 = vmatprep.mubr.bf16.mxu0 %v852
        %1763 = vmatmul.mubr.bf16.gmra.mrb[0].mxu0 %v851
        %v1764 = vpop.f32.mrb[0].mxu0
        %v1765 = vadd.f32 %v1604, %v1764
        %v1766 = vpop.f32.mrb[0].mxu0
        %v1767 = vpop.f32.mrb[0].mxu0
        %v1768 = vadd.f32 %v1607, %v1767
        %v1769 = vpop.f32.mrb[0].mxu0
        %1770 = vmatprep.mubr.bf16.mxu0 %v861
        %1771 = vmatmul.mubr.bf16.gmra.mrb[0].mxu0 %v860
        %v1772 = vpop.f32.mrb[0].mxu0
        %v1773 = vadd.f32 %v1612, %v1772
        %v1774 = vpop.f32.mrb[0].mxu0
        %v1775 = vpop.f32.mrb[0].mxu0
        %v1776 = vadd.f32 %v1615, %v1775
        %v1777 = vpop.f32.mrb[0].mxu0
        %1778 = vmatprep.mubr.bf16.mxu0 %v870
        %1779 = vmatmul.mubr.bf16.gmra.mrb[0].mxu0 %v869
        %v1780 = vpop.f32.mrb[0].mxu0
        %v1781 = vadd.f32 %v1620, %v1780
        %v1782 = vpop.f32.mrb[0].mxu0
        %v1783 = vpop.f32.mrb[0].mxu0
        %v1784 = vadd.f32 %v1623, %v1783
        %v1785 = vpop.f32.mrb[0].mxu0
        %1786 = vmatprep.mubr.bf16.mxu0 %v879
        %1787 = vmatmul.mubr.bf16.gmra.mrb[0].mxu0 %v878
        %v1788 = vpop.f32.mrb[0].mxu0
        %v1789 = vadd.f32 %v1628, %v1788
        %v1790 = vpop.f32.mrb[0].mxu0
        %v1791 = vpop.f32.mrb[0].mxu0
        %v1792 = vadd.f32 %v1631, %v1791
        %v1793 = vpop.f32.mrb[0].mxu0
        %1794 = vmatprep.mubr.bf16.mxu0 %v888
        %1795 = vmatmul.mubr.bf16.gmra.mrb[0].mxu0 %v887
        %v1796 = vpop.f32.mrb[0].mxu0
        %v1797 = vadd.f32 %v1636, %v1796
        %v1798 = vpop.f32.mrb[0].mxu0
        %v1799 = vpop.f32.mrb[0].mxu0
        %v1800 = vadd.f32 %v1639, %v1799
        %v1801 = vpop.f32.mrb[0].mxu0
        %1802 = vmatprep.mubr.bf16.mxu0 %v897
        %1803 = vmatmul.mubr.bf16.gmra.mrb[0].mxu0 %v896
        %v1804 = vpop.f32.mrb[0].mxu0
        %v1805 = vadd.f32 %v1644, %v1804
        %v1806 = vpop.f32.mrb[0].mxu0
        %v1807 = vpop.f32.mrb[0].mxu0
        %v1808 = vadd.f32 %v1647, %v1807
        %v1809 = vpop.f32.mrb[0].mxu0
        %1810 = vmatprep.mubr.bf16.mxu0 %v906
        %1811 = vmatmul.mubr.bf16.gmra.mrb[0].mxu0 %v905
        %v1812 = vpop.f32.mrb[0].mxu0
        %v1813 = vadd.f32 %v1652, %v1812
        %v1814 = vpop.f32.mrb[0].mxu0
        %v1815 = vpop.f32.mrb[0].mxu0
        %v1816 = vadd.f32 %v1655, %v1815
        %v1817 = vpop.f32.mrb[0].mxu0
        %1818 = vmatprep.mubr.bf16.mxu0 %v915
        %1819 = vmatmul.mubr.bf16.gmra.mrb[0].mxu0 %v914
        %v1820 = vpop.f32.mrb[0].mxu0
        %v1821 = vadd.f32 %v1660, %v1820
        %v1822 = vpop.f32.mrb[0].mxu0
        %v1823 = vpop.f32.mrb[0].mxu0
        %v1824 = vadd.f32 %v1663, %v1823
        %v1825 = vpop.f32.mrb[0].mxu0
        %1826 = vmatprep.mubr.bf16.mxu0 %v924
        %1827 = vmatmul.mubr.bf16.gmra.mrb[0].mxu0 %v923
        %v1828 = vpop.f32.mrb[0].mxu0
        %v1829 = vadd.f32 %v1668, %v1828
        %v1830 = vpop.f32.mrb[0].mxu0
        %v1831 = vpop.f32.mrb[0].mxu0
        %v1832 = vadd.f32 %v1671, %v1831
        %v1833 = vpop.f32.mrb[0].mxu0
        %1834 = vmatprep.mubr.bf16.mxu0 %v933
        %1835 = vmatmul.mubr.bf16.gmra.mrb[0].mxu0 %v932
        %v1836 = vpop.f32.mrb[0].mxu0
        %v1837 = vadd.f32 %v1676, %v1836
        %v1838 = vpop.f32.mrb[0].mxu0
        %v1839 = vpop.f32.mrb[0].mxu0
        %v1840 = vadd.f32 %v1679, %v1839
        %v1841 = vpop.f32.mrb[0].mxu0
        %1842 = vmatprep.mubr.bf16.mxu0 %v942
        %1843 = vmatmul.mubr.bf16.gmra.mrb[0].mxu0 %v941
        %v1844 = vpop.f32.mrb[0].mxu0
        %v1845 = vadd.f32 %v1684, %v1844
        %v1846 = vpop.f32.mrb[0].mxu0
        %v1847 = vpop.f32.mrb[0].mxu0
        %v1848 = vadd.f32 %v1687, %v1847
        %v1849 = vpop.f32.mrb[0].mxu0
        %1850 = vmatprep.mubr.bf16.mxu0 %v951
        %1851 = vmatmul.mubr.bf16.gmra.mrb[0].mxu0 %v950
        %v1852 = vpop.f32.mrb[0].mxu0
        %v1853 = vadd.f32 %v1692, %v1852
        %v1854 = vpop.f32.mrb[0].mxu0
        %v1855 = vpop.f32.mrb[0].mxu0
        %v1856 = vadd.f32 %v1695, %v1855
        %v1857 = vpop.f32.mrb[0].mxu0
        %1858 = vmatprep.mubr.bf16.mxu0 %v960
        %1859 = vmatmul.mubr.bf16.gmra.mrb[0].mxu0 %v959
        %v1860 = vpop.f32.mrb[0].mxu0
        %v1861 = vadd.f32 %v1700, %v1860
        %v1862 = vpop.f32.mrb[0].mxu0
        %v1863 = vpop.f32.mrb[0].mxu0
        %v1864 = vadd.f32 %v1703, %v1863
        %v1865 = vpop.f32.mrb[0].mxu0
        %1866 = vmatprep.mubr.bf16.mxu0 %v969
        %1867 = vmatmul.mubr.bf16.gmra.mrb[0].mxu0 %v968
        %v1868 = vpop.f32.mrb[0].mxu0
        %v1869 = vadd.f32 %v1708, %v1868
        %v1870 = vpop.f32.mrb[0].mxu0
        %v1871 = vpop.f32.mrb[0].mxu0
        %v1872 = vadd.f32 %v1711, %v1871
        %v1873 = vpop.f32.mrb[0].mxu0
        %1874 = vmatprep.mubr.bf16.mxu0 %v978
        %1875 = vmatmul.mubr.bf16.gmra.mrb[0].mxu0 %v977
        %v1876 = vpop.f32.mrb[0].mxu0
        %v1877 = vadd.f32 %v1716, %v1876
        %v1878 = vpop.f32.mrb[0].mxu0
        %v1879 = vpop.f32.mrb[0].mxu0
        %v1880 = vadd.f32 %v1719, %v1879
        %v1881 = vpop.f32.mrb[0].mxu0
        %1882 = vmatprep.mubr.bf16.mxu0 %v987
        %1883 = vmatmul.mubr.bf16.gmra.mrb[0].mxu0 %v986
        %v1884 = vpop.f32.mrb[0].mxu0
        %v1885 = vadd.f32 %v1724, %v1884
        %v1886 = vpop.f32.mrb[0].mxu0
        %v1887 = vpop.f32.mrb[0].mxu0
        %v1888 = vadd.f32 %v1727, %v1887
        %v1889 = vpop.f32.mrb[0].mxu0
        %1890 = vdwg.mxu0
        %1891 = vmatprep.subr.bf16.mxu0 0
        %1892 = vmatpush1.bf16.msra.mxu0 %v1457
        %1893 = vmatprep.subr.bf16.mxu0 0
        %1894 = vmatpush1.bf16.msra.mxu0 %v1458
        %1895 = vmatprep.subr.bf16.mxu0 0
        %1896 = vmatpush1.bf16.msra.mxu0 %v1459
        %1897 = vmatprep.subr.bf16.mxu0 0
        %1898 = vmatpush1.bf16.msra.mxu0 %v1460
        %1899 = vmatprep.subr.bf16.mxu0 0
        %1900 = vmatpush1.bf16.msra.mxu0 %v1461
        %1901 = vmatprep.subr.bf16.mxu0 0
        %1902 = vmatpush1.bf16.msra.mxu0 %v1462
        %1903 = vmatprep.subr.bf16.mxu0 0
        %1904 = vmatpush1.bf16.msra.mxu0 %v1463
        %1905 = vmatprep.subr.bf16.mxu0 0
        %1906 = vmatpush1.bf16.msra.mxu0 %v1464
        %1907 = vmatprep.subr.bf16.mxu0 0
        %1908 = vmatpush1.bf16.msra.mxu0 %v1465
        %1909 = vmatprep.subr.bf16.mxu0 0
        %1910 = vmatpush1.bf16.msra.mxu0 %v1466
        %1911 = vmatprep.subr.bf16.mxu0 0
        %1912 = vmatpush1.bf16.msra.mxu0 %v1467
        %1913 = vmatprep.subr.bf16.mxu0 0
        %1914 = vmatpush1.bf16.msra.mxu0 %v1468
        %1915 = vmatprep.subr.bf16.mxu0 0
        %1916 = vmatpush1.bf16.msra.mxu0 %v1469
        %1917 = vmatprep.subr.bf16.mxu0 0
        %1918 = vmatpush1.bf16.msra.mxu0 %v1470
        %1919 = vmatprep.subr.bf16.mxu0 0
        %1920 = vmatpush1.bf16.msra.mxu0 %v1471
        %1921 = vmatprep.subr.bf16.mxu0 0
        %1922 = vmatpush1.bf16.msra.mxu0 %v1472
        %1923 = vmatprep.mubr.bf16.mxu0 %v854
        %1924 = vmatmul.mubr.bf16.gmra.mrb[0].mxu0 %v853
        %v1925 = vpop.f32.mrb[0].mxu0
        %v1926 = vadd.f32 %v1765, %v1925
        %v1927 = vpop.f32.mrb[0].mxu0
        %v1928 = vpop.f32.mrb[0].mxu0
        %v1929 = vadd.f32 %v1768, %v1928
        %v1930 = vpop.f32.mrb[0].mxu0
        %1931 = vmatprep.mubr.bf16.mxu0 %v863
        %1932 = vmatmul.mubr.bf16.gmra.mrb[0].mxu0 %v862
        %v1933 = vpop.f32.mrb[0].mxu0
        %v1934 = vadd.f32 %v1773, %v1933
        %v1935 = vpop.f32.mrb[0].mxu0
        %v1936 = vpop.f32.mrb[0].mxu0
        %v1937 = vadd.f32 %v1776, %v1936
        %v1938 = vpop.f32.mrb[0].mxu0
        %1939 = vmatprep.mubr.bf16.mxu0 %v872
        %1940 = vmatmul.mubr.bf16.gmra.mrb[0].mxu0 %v871
        %v1941 = vpop.f32.mrb[0].mxu0
        %v1942 = vadd.f32 %v1781, %v1941
        %v1943 = vpop.f32.mrb[0].mxu0
        %v1944 = vpop.f32.mrb[0].mxu0
        %v1945 = vadd.f32 %v1784, %v1944
        %v1946 = vpop.f32.mrb[0].mxu0
        %1947 = vmatprep.mubr.bf16.mxu0 %v881
        %1948 = vmatmul.mubr.bf16.gmra.mrb[0].mxu0 %v880
        %v1949 = vpop.f32.mrb[0].mxu0
        %v1950 = vadd.f32 %v1789, %v1949
        %v1951 = vpop.f32.mrb[0].mxu0
        %v1952 = vpop.f32.mrb[0].mxu0
        %v1953 = vadd.f32 %v1792, %v1952
        %v1954 = vpop.f32.mrb[0].mxu0
        %1955 = vmatprep.mubr.bf16.mxu0 %v890
        %1956 = vmatmul.mubr.bf16.gmra.mrb[0].mxu0 %v889
        %v1957 = vpop.f32.mrb[0].mxu0
        %v1958 = vadd.f32 %v1797, %v1957
        %v1959 = vpop.f32.mrb[0].mxu0
        %v1960 = vpop.f32.mrb[0].mxu0
        %v1961 = vadd.f32 %v1800, %v1960
        %v1962 = vpop.f32.mrb[0].mxu0
        %1963 = vmatprep.mubr.bf16.mxu0 %v899
        %1964 = vmatmul.mubr.bf16.gmra.mrb[0].mxu0 %v898
        %v1965 = vpop.f32.mrb[0].mxu0
        %v1966 = vadd.f32 %v1805, %v1965
        %v1967 = vpop.f32.mrb[0].mxu0
        %v1968 = vpop.f32.mrb[0].mxu0
        %v1969 = vadd.f32 %v1808, %v1968
        %v1970 = vpop.f32.mrb[0].mxu0
        %1971 = vmatprep.mubr.bf16.mxu0 %v908
        %1972 = vmatmul.mubr.bf16.gmra.mrb[0].mxu0 %v907
        %v1973 = vpop.f32.mrb[0].mxu0
        %v1974 = vadd.f32 %v1813, %v1973
        %v1975 = vpop.f32.mrb[0].mxu0
        %v1976 = vpop.f32.mrb[0].mxu0
        %v1977 = vadd.f32 %v1816, %v1976
        %v1978 = vpop.f32.mrb[0].mxu0
        %1979 = vmatprep.mubr.bf16.mxu0 %v917
        %1980 = vmatmul.mubr.bf16.gmra.mrb[0].mxu0 %v916
        %v1981 = vpop.f32.mrb[0].mxu0
        %v1982 = vadd.f32 %v1821, %v1981
        %v1983 = vpop.f32.mrb[0].mxu0
        %v1984 = vpop.f32.mrb[0].mxu0
        %v1985 = vadd.f32 %v1824, %v1984
        %v1986 = vpop.f32.mrb[0].mxu0
        %1987 = vmatprep.mubr.bf16.mxu0 %v926
        %1988 = vmatmul.mubr.bf16.gmra.mrb[0].mxu0 %v925
        %v1989 = vpop.f32.mrb[0].mxu0
        %v1990 = vadd.f32 %v1829, %v1989
        %v1991 = vpop.f32.mrb[0].mxu0
        %v1992 = vpop.f32.mrb[0].mxu0
        %v1993 = vadd.f32 %v1832, %v1992
        %v1994 = vpop.f32.mrb[0].mxu0
        %1995 = vmatprep.mubr.bf16.mxu0 %v935
        %1996 = vmatmul.mubr.bf16.gmra.mrb[0].mxu0 %v934
        %v1997 = vpop.f32.mrb[0].mxu0
        %v1998 = vadd.f32 %v1837, %v1997
        %v1999 = vpop.f32.mrb[0].mxu0
        %v2000 = vpop.f32.mrb[0].mxu0
        %v2001 = vadd.f32 %v1840, %v2000
        %v2002 = vpop.f32.mrb[0].mxu0
        %2003 = vmatprep.mubr.bf16.mxu0 %v944
        %2004 = vmatmul.mubr.bf16.gmra.mrb[0].mxu0 %v943
        %v2005 = vpop.f32.mrb[0].mxu0
        %v2006 = vadd.f32 %v1845, %v2005
        %v2007 = vpop.f32.mrb[0].mxu0
        %v2008 = vpop.f32.mrb[0].mxu0
        %v2009 = vadd.f32 %v1848, %v2008
        %v2010 = vpop.f32.mrb[0].mxu0
        %2011 = vmatprep.mubr.bf16.mxu0 %v953
        %2012 = vmatmul.mubr.bf16.gmra.mrb[0].mxu0 %v952
        %v2013 = vpop.f32.mrb[0].mxu0
        %v2014 = vadd.f32 %v1853, %v2013
        %v2015 = vpop.f32.mrb[0].mxu0
        %v2016 = vpop.f32.mrb[0].mxu0
        %v2017 = vadd.f32 %v1856, %v2016
        %v2018 = vpop.f32.mrb[0].mxu0
        %2019 = vmatprep.mubr.bf16.mxu0 %v962
        %2020 = vmatmul.mubr.bf16.gmra.mrb[0].mxu0 %v961
        %v2021 = vpop.f32.mrb[0].mxu0
        %v2022 = vadd.f32 %v1861, %v2021
        %v2023 = vpop.f32.mrb[0].mxu0
        %v2024 = vpop.f32.mrb[0].mxu0
        %v2025 = vadd.f32 %v1864, %v2024
        %v2026 = vpop.f32.mrb[0].mxu0
        %2027 = vmatprep.mubr.bf16.mxu0 %v971
        %2028 = vmatmul.mubr.bf16.gmra.mrb[0].mxu0 %v970
        %v2029 = vpop.f32.mrb[0].mxu0
        %v2030 = vadd.f32 %v1869, %v2029
        %v2031 = vpop.f32.mrb[0].mxu0
        %v2032 = vpop.f32.mrb[0].mxu0
        %v2033 = vadd.f32 %v1872, %v2032
        %v2034 = vpop.f32.mrb[0].mxu0
        %2035 = vmatprep.mubr.bf16.mxu0 %v980
        %2036 = vmatmul.mubr.bf16.gmra.mrb[0].mxu0 %v979
        %v2037 = vpop.f32.mrb[0].mxu0
        %v2038 = vadd.f32 %v1877, %v2037
        %v2039 = vpop.f32.mrb[0].mxu0
        %v2040 = vpop.f32.mrb[0].mxu0
        %v2041 = vadd.f32 %v1880, %v2040
        %v2042 = vpop.f32.mrb[0].mxu0
        %2043 = vmatprep.mubr.bf16.mxu0 %v989
        %2044 = vmatmul.mubr.bf16.gmra.mrb[0].mxu0 %v988
        %v2045 = vpop.f32.mrb[0].mxu0
        %v2046 = vadd.f32 %v1885, %v2045
        %v2047 = vpop.f32.mrb[0].mxu0
        %v2048 = vpop.f32.mrb[0].mxu0
        %v2049 = vadd.f32 %v1888, %v2048
        %v2050 = vpop.f32.mrb[0].mxu0
        %2051 = vdwg.mxu0
        %2052 = vmatprep.subr.bf16.mxu0 0
        %2053 = vmatpush1.bf16.msra.mxu0 %v1473
        %2054 = vmatprep.subr.bf16.mxu0 0
        %2055 = vmatpush1.bf16.msra.mxu0 %v1474
        %2056 = vmatprep.subr.bf16.mxu0 0
        %2057 = vmatpush1.bf16.msra.mxu0 %v1475
        %2058 = vmatprep.subr.bf16.mxu0 0
        %2059 = vmatpush1.bf16.msra.mxu0 %v1476
        %2060 = vmatprep.subr.bf16.mxu0 0
        %2061 = vmatpush1.bf16.msra.mxu0 %v1477
        %2062 = vmatprep.subr.bf16.mxu0 0
        %2063 = vmatpush1.bf16.msra.mxu0 %v1478
        %2064 = vmatprep.subr.bf16.mxu0 0
        %2065 = vmatpush1.bf16.msra.mxu0 %v1479
        %2066 = vmatprep.subr.bf16.mxu0 0
        %2067 = vmatpush1.bf16.msra.mxu0 %v1480
        %2068 = vmatprep.subr.bf16.mxu0 0
        %2069 = vmatpush1.bf16.msra.mxu0 %v1481
        %2070 = vmatprep.subr.bf16.mxu0 0
        %2071 = vmatpush1.bf16.msra.mxu0 %v1482
        %2072 = vmatprep.subr.bf16.mxu0 0
        %2073 = vmatpush1.bf16.msra.mxu0 %v1483
        %2074 = vmatprep.subr.bf16.mxu0 0
        %2075 = vmatpush1.bf16.msra.mxu0 %v1484
        %2076 = vmatprep.subr.bf16.mxu0 0
        %2077 = vmatpush1.bf16.msra.mxu0 %v1485
        %2078 = vmatprep.subr.bf16.mxu0 0
        %2079 = vmatpush1.bf16.msra.mxu0 %v1486
        %2080 = vmatprep.subr.bf16.mxu0 0
        %2081 = vmatpush1.bf16.msra.mxu0 %v1487
        %2082 = vmatprep.subr.bf16.mxu0 0
        %2083 = vmatpush1.bf16.msra.mxu0 %v1488
        %2084 = vmatprep.mubr.bf16.mxu0 %v856
        %2085 = vmatmul.mubr.bf16.gmra.mrb[0].mxu0 %v855
        %v2086 = vpop.f32.mrb[0].mxu0
        %v2087 = vadd.f32 %v1926, %v2086
        %v2088 = vpop.f32.mrb[0].mxu0
        %v2089 = vpop.f32.mrb[0].mxu0
        %v2090 = vadd.f32 %v1929, %v2089
        %v2091 = vpop.f32.mrb[0].mxu0
        %2092 = vmatprep.mubr.bf16.mxu0 %v865
        %2093 = vmatmul.mubr.bf16.gmra.mrb[0].mxu0 %v864
        %v2094 = vpop.f32.mrb[0].mxu0
        %v2095 = vadd.f32 %v1934, %v2094
        %v2096 = vpop.f32.mrb[0].mxu0
        %v2097 = vpop.f32.mrb[0].mxu0
        %v2098 = vadd.f32 %v1937, %v2097
        %v2099 = vpop.f32.mrb[0].mxu0
        %2100 = vmatprep.mubr.bf16.mxu0 %v874
        %2101 = vmatmul.mubr.bf16.gmra.mrb[0].mxu0 %v873
        %v2102 = vpop.f32.mrb[0].mxu0
        %v2103 = vadd.f32 %v1942, %v2102
        %v2104 = vpop.f32.mrb[0].mxu0
        %v2105 = vpop.f32.mrb[0].mxu0
        %v2106 = vadd.f32 %v1945, %v2105
        %v2107 = vpop.f32.mrb[0].mxu0
        %2108 = vmatprep.mubr.bf16.mxu0 %v883
        %2109 = vmatmul.mubr.bf16.gmra.mrb[0].mxu0 %v882
        %v2110 = vpop.f32.mrb[0].mxu0
        %v2111 = vadd.f32 %v1950, %v2110
        %v2112 = vpop.f32.mrb[0].mxu0
        %v2113 = vpop.f32.mrb[0].mxu0
        %v2114 = vadd.f32 %v1953, %v2113
        %v2115 = vpop.f32.mrb[0].mxu0
        %2116 = vmatprep.mubr.bf16.mxu0 %v892
        %2117 = vmatmul.mubr.bf16.gmra.mrb[0].mxu0 %v891
        %v2118 = vpop.f32.mrb[0].mxu0
        %v2119 = vadd.f32 %v1958, %v2118
        %v2120 = vpop.f32.mrb[0].mxu0
        %v2121 = vpop.f32.mrb[0].mxu0
        %v2122 = vadd.f32 %v1961, %v2121
        %v2123 = vpop.f32.mrb[0].mxu0
        %2124 = vmatprep.mubr.bf16.mxu0 %v901
        %2125 = vmatmul.mubr.bf16.gmra.mrb[0].mxu0 %v900
        %v2126 = vpop.f32.mrb[0].mxu0
        %v2127 = vadd.f32 %v1966, %v2126
        %v2128 = vpop.f32.mrb[0].mxu0
        %v2129 = vpop.f32.mrb[0].mxu0
        %v2130 = vadd.f32 %v1969, %v2129
        %v2131 = vpop.f32.mrb[0].mxu0
        %2132 = vmatprep.mubr.bf16.mxu0 %v910
        %2133 = vmatmul.mubr.bf16.gmra.mrb[0].mxu0 %v909
        %v2134 = vpop.f32.mrb[0].mxu0
        %v2135 = vadd.f32 %v1974, %v2134
        %v2136 = vpop.f32.mrb[0].mxu0
        %v2137 = vpop.f32.mrb[0].mxu0
        %v2138 = vadd.f32 %v1977, %v2137
        %v2139 = vpop.f32.mrb[0].mxu0
        %2140 = vmatprep.mubr.bf16.mxu0 %v919
        %2141 = vmatmul.mubr.bf16.gmra.mrb[0].mxu0 %v918
        %v2142 = vpop.f32.mrb[0].mxu0
        %v2143 = vadd.f32 %v1982, %v2142
        %v2144 = vpop.f32.mrb[0].mxu0
        %v2145 = vpop.f32.mrb[0].mxu0
        %v2146 = vadd.f32 %v1985, %v2145
        %v2147 = vpop.f32.mrb[0].mxu0
        %2148 = vmatprep.mubr.bf16.mxu0 %v928
        %2149 = vmatmul.mubr.bf16.gmra.mrb[0].mxu0 %v927
        %v2150 = vpop.f32.mrb[0].mxu0
        %v2151 = vadd.f32 %v1990, %v2150
        %v2152 = vpop.f32.mrb[0].mxu0
        %v2153 = vpop.f32.mrb[0].mxu0
        %v2154 = vadd.f32 %v1993, %v2153
        %v2155 = vpop.f32.mrb[0].mxu0
        %2156 = vmatprep.mubr.bf16.mxu0 %v937
        %2157 = vmatmul.mubr.bf16.gmra.mrb[0].mxu0 %v936
        %v2158 = vpop.f32.mrb[0].mxu0
        %v2159 = vadd.f32 %v1998, %v2158
        %v2160 = vpop.f32.mrb[0].mxu0
        %v2161 = vpop.f32.mrb[0].mxu0
        %v2162 = vadd.f32 %v2001, %v2161
        %v2163 = vpop.f32.mrb[0].mxu0
        %2164 = vmatprep.mubr.bf16.mxu0 %v946
        %2165 = vmatmul.mubr.bf16.gmra.mrb[0].mxu0 %v945
        %v2166 = vpop.f32.mrb[0].mxu0
        %v2167 = vadd.f32 %v2006, %v2166
        %v2168 = vpop.f32.mrb[0].mxu0
        %v2169 = vpop.f32.mrb[0].mxu0
        %v2170 = vadd.f32 %v2009, %v2169
        %v2171 = vpop.f32.mrb[0].mxu0
        %2172 = vmatprep.mubr.bf16.mxu0 %v955
        %2173 = vmatmul.mubr.bf16.gmra.mrb[0].mxu0 %v954
        %v2174 = vpop.f32.mrb[0].mxu0
        %v2175 = vadd.f32 %v2014, %v2174
        %v2176 = vpop.f32.mrb[0].mxu0
        %v2177 = vpop.f32.mrb[0].mxu0
        %v2178 = vadd.f32 %v2017, %v2177
        %v2179 = vpop.f32.mrb[0].mxu0
        %2180 = vmatprep.mubr.bf16.mxu0 %v964
        %2181 = vmatmul.mubr.bf16.gmra.mrb[0].mxu0 %v963
        %v2182 = vpop.f32.mrb[0].mxu0
        %v2183 = vadd.f32 %v2022, %v2182
        %v2184 = vpop.f32.mrb[0].mxu0
        %v2185 = vpop.f32.mrb[0].mxu0
        %v2186 = vadd.f32 %v2025, %v2185
        %v2187 = vpop.f32.mrb[0].mxu0
        %2188 = vmatprep.mubr.bf16.mxu0 %v973
        %2189 = vmatmul.mubr.bf16.gmra.mrb[0].mxu0 %v972
        %v2190 = vpop.f32.mrb[0].mxu0
        %v2191 = vadd.f32 %v2030, %v2190
        %v2192 = vpop.f32.mrb[0].mxu0
        %v2193 = vpop.f32.mrb[0].mxu0
        %v2194 = vadd.f32 %v2033, %v2193
        %v2195 = vpop.f32.mrb[0].mxu0
        %2196 = vmatprep.mubr.bf16.mxu0 %v982
        %2197 = vmatmul.mubr.bf16.gmra.mrb[0].mxu0 %v981
        %v2198 = vpop.f32.mrb[0].mxu0
        %v2199 = vadd.f32 %v2038, %v2198
        %v2200 = vpop.f32.mrb[0].mxu0
        %v2201 = vpop.f32.mrb[0].mxu0
        %v2202 = vadd.f32 %v2041, %v2201
        %v2203 = vpop.f32.mrb[0].mxu0
        %2204 = vmatprep.mubr.bf16.mxu0 %v991
        %2205 = vmatmul.mubr.bf16.gmra.mrb[0].mxu0 %v990
        %v2206 = vpop.f32.mrb[0].mxu0
        %v2207 = vadd.f32 %v2046, %v2206
        %v2208 = vpop.f32.mrb[0].mxu0
        %v2209 = vpop.f32.mrb[0].mxu0
        %v2210 = vadd.f32 %v2049, %v2209
        %v2211 = vpop.f32.mrb[0].mxu0
        %2212 = vdwg.mxu0
        %2213 = vmatprep.subr.bf16.mxu0 0
        %2214 = vmatpush1.bf16.msra.mxu0 %v1489
        %2215 = vmatprep.subr.bf16.mxu0 0
        %2216 = vmatpush1.bf16.msra.mxu0 %v1490
        %2217 = vmatprep.subr.bf16.mxu0 0
        %2218 = vmatpush1.bf16.msra.mxu0 %v1491
        %2219 = vmatprep.subr.bf16.mxu0 0
        %2220 = vmatpush1.bf16.msra.mxu0 %v1492
        %2221 = vmatprep.subr.bf16.mxu0 0
        %2222 = vmatpush1.bf16.msra.mxu0 %v1493
        %2223 = vmatprep.subr.bf16.mxu0 0
        %2224 = vmatpush1.bf16.msra.mxu0 %v1494
        %2225 = vmatprep.subr.bf16.mxu0 0
        %2226 = vmatpush1.bf16.msra.mxu0 %v1495
        %2227 = vmatprep.subr.bf16.mxu0 0
        %2228 = vmatpush1.bf16.msra.mxu0 %v1496
        %2229 = vmatprep.subr.bf16.mxu0 0
        %2230 = vmatpush1.bf16.msra.mxu0 0
        %2231 = vmatprep.subr.bf16.mxu0 0
        %2232 = vmatpush1.bf16.msra.mxu0 0
        %2233 = vmatprep.subr.bf16.mxu0 0
        %2234 = vmatpush1.bf16.msra.mxu0 0
        %2235 = vmatprep.subr.bf16.mxu0 0
        %2236 = vmatpush1.bf16.msra.mxu0 0
        %2237 = vmatprep.subr.bf16.mxu0 0
        %2238 = vmatpush1.bf16.msra.mxu0 0
        %2239 = vmatprep.subr.bf16.mxu0 0
        %2240 = vmatpush1.bf16.msra.mxu0 0
        %2241 = vmatprep.subr.bf16.mxu0 0
        %2242 = vmatpush1.bf16.msra.mxu0 0
        %2243 = vmatprep.subr.bf16.mxu0 0
        %2244 = vmatpush1.bf16.msra.mxu0 0
        %2245 = vmatprep.mubr.bf16.mxu0 0
        %2246 = vmatmul.mubr.bf16.gmra.mrb[0].mxu0 %v857
        %v2247 = vpop.f32.mrb[0].mxu0
        %v2248 = vadd.f32 %v2087, %v2247
        %v2249 = vpop.f32.mrb[0].mxu0
        %v2250 = vpop.f32.mrb[0].mxu0
        %v2251 = vadd.f32 %v2090, %v2250
        %v2252 = vpop.f32.mrb[0].mxu0
        %2253 = vmatprep.mubr.bf16.mxu0 0
        %2254 = vmatmul.mubr.bf16.gmra.mrb[0].mxu0 %v866
        %v2255 = vpop.f32.mrb[0].mxu0
        %v2256 = vadd.f32 %v2095, %v2255
        %v2257 = vpop.f32.mrb[0].mxu0
        %v2258 = vpop.f32.mrb[0].mxu0
        %v2259 = vadd.f32 %v2098, %v2258
        %v2260 = vpop.f32.mrb[0].mxu0
        %2261 = vmatprep.mubr.bf16.mxu0 0
        %2262 = vmatmul.mubr.bf16.gmra.mrb[0].mxu0 %v875
        %v2263 = vpop.f32.mrb[0].mxu0
        %v2264 = vadd.f32 %v2103, %v2263
        %v2265 = vpop.f32.mrb[0].mxu0
        %v2266 = vpop.f32.mrb[0].mxu0
        %v2267 = vadd.f32 %v2106, %v2266
        %v2268 = vpop.f32.mrb[0].mxu0
        %2269 = vmatprep.mubr.bf16.mxu0 0
        %2270 = vmatmul.mubr.bf16.gmra.mrb[0].mxu0 %v884
        %v2271 = vpop.f32.mrb[0].mxu0
        %v2272 = vadd.f32 %v2111, %v2271
        %v2273 = vpop.f32.mrb[0].mxu0
        %v2274 = vpop.f32.mrb[0].mxu0
        %v2275 = vadd.f32 %v2114, %v2274
        %v2276 = vpop.f32.mrb[0].mxu0
        %2277 = vmatprep.mubr.bf16.mxu0 0
        %2278 = vmatmul.mubr.bf16.gmra.mrb[0].mxu0 %v893
        %v2279 = vpop.f32.mrb[0].mxu0
        %v2280 = vadd.f32 %v2119, %v2279
        %v2281 = vpop.f32.mrb[0].mxu0
        %v2282 = vpop.f32.mrb[0].mxu0
        %v2283 = vadd.f32 %v2122, %v2282
        %v2284 = vpop.f32.mrb[0].mxu0
        %2285 = vmatprep.mubr.bf16.mxu0 0
        %2286 = vmatmul.mubr.bf16.gmra.mrb[0].mxu0 %v902
        %v2287 = vpop.f32.mrb[0].mxu0
        %v2288 = vadd.f32 %v2127, %v2287
        %v2289 = vpop.f32.mrb[0].mxu0
        %v2290 = vpop.f32.mrb[0].mxu0
        %v2291 = vadd.f32 %v2130, %v2290
        %v2292 = vpop.f32.mrb[0].mxu0
        %2293 = vmatprep.mubr.bf16.mxu0 0
        %2294 = vmatmul.mubr.bf16.gmra.mrb[0].mxu0 %v911
        %v2295 = vpop.f32.mrb[0].mxu0
        %v2296 = vadd.f32 %v2135, %v2295
        %v2297 = vpop.f32.mrb[0].mxu0
        %v2298 = vpop.f32.mrb[0].mxu0
        %v2299 = vadd.f32 %v2138, %v2298
        %v2300 = vpop.f32.mrb[0].mxu0
        %2301 = vmatprep.mubr.bf16.mxu0 0
        %2302 = vmatmul.mubr.bf16.gmra.mrb[0].mxu0 %v920
        %v2303 = vpop.f32.mrb[0].mxu0
        %v2304 = vadd.f32 %v2143, %v2303
        %v2305 = vpop.f32.mrb[0].mxu0
        %v2306 = vpop.f32.mrb[0].mxu0
        %v2307 = vadd.f32 %v2146, %v2306
        %v2308 = vpop.f32.mrb[0].mxu0
        %2309 = vmatprep.mubr.bf16.mxu0 0
        %2310 = vmatmul.mubr.bf16.gmra.mrb[0].mxu0 %v929
        %v2311 = vpop.f32.mrb[0].mxu0
        %v2312 = vadd.f32 %v2151, %v2311
        %v2313 = vpop.f32.mrb[0].mxu0
        %v2314 = vpop.f32.mrb[0].mxu0
        %v2315 = vadd.f32 %v2154, %v2314
        %v2316 = vpop.f32.mrb[0].mxu0
        %2317 = vmatprep.mubr.bf16.mxu0 0
        %2318 = vmatmul.mubr.bf16.gmra.mrb[0].mxu0 %v938
        %v2319 = vpop.f32.mrb[0].mxu0
        %v2320 = vadd.f32 %v2159, %v2319
        %v2321 = vpop.f32.mrb[0].mxu0
        %v2322 = vpop.f32.mrb[0].mxu0
        %v2323 = vadd.f32 %v2162, %v2322
        %v2324 = vpop.f32.mrb[0].mxu0
        %2325 = vmatprep.mubr.bf16.mxu0 0
        %2326 = vmatmul.mubr.bf16.gmra.mrb[0].mxu0 %v947
        %v2327 = vpop.f32.mrb[0].mxu0
        %v2328 = vadd.f32 %v2167, %v2327
        %v2329 = vpop.f32.mrb[0].mxu0
        %v2330 = vpop.f32.mrb[0].mxu0
        %v2331 = vadd.f32 %v2170, %v2330
        %v2332 = vpop.f32.mrb[0].mxu0
        %2333 = vmatprep.mubr.bf16.mxu0 0
        %2334 = vmatmul.mubr.bf16.gmra.mrb[0].mxu0 %v956
        %v2335 = vpop.f32.mrb[0].mxu0
        %v2336 = vadd.f32 %v2175, %v2335
        %v2337 = vpop.f32.mrb[0].mxu0
        %v2338 = vpop.f32.mrb[0].mxu0
        %v2339 = vadd.f32 %v2178, %v2338
        %v2340 = vpop.f32.mrb[0].mxu0
        %2341 = vmatprep.mubr.bf16.mxu0 0
        %2342 = vmatmul.mubr.bf16.gmra.mrb[0].mxu0 %v965
        %v2343 = vpop.f32.mrb[0].mxu0
        %v2344 = vadd.f32 %v2183, %v2343
        %v2345 = vpop.f32.mrb[0].mxu0
        %v2346 = vpop.f32.mrb[0].mxu0
        %v2347 = vadd.f32 %v2186, %v2346
        %v2348 = vpop.f32.mrb[0].mxu0
        %2349 = vmatprep.mubr.bf16.mxu0 0
        %2350 = vmatmul.mubr.bf16.gmra.mrb[0].mxu0 %v974
        %v2351 = vpop.f32.mrb[0].mxu0
        %v2352 = vadd.f32 %v2191, %v2351
        %v2353 = vpop.f32.mrb[0].mxu0
        %v2354 = vpop.f32.mrb[0].mxu0
        %v2355 = vadd.f32 %v2194, %v2354
        %v2356 = vpop.f32.mrb[0].mxu0
        %2357 = vmatprep.mubr.bf16.mxu0 0
        %2358 = vmatmul.mubr.bf16.gmra.mrb[0].mxu0 %v983
        %v2359 = vpop.f32.mrb[0].mxu0
        %v2360 = vadd.f32 %v2199, %v2359
        %v2361 = vpop.f32.mrb[0].mxu0
        %v2362 = vpop.f32.mrb[0].mxu0
        %v2363 = vadd.f32 %v2202, %v2362
        %v2364 = vpop.f32.mrb[0].mxu0
        %2365 = vmatprep.mubr.bf16.mxu0 0
        %2366 = vmatmul.mubr.bf16.gmra.mrb[0].mxu0 %v992
        %v2367 = vpop.f32.mrb[0].mxu0
        %v2368 = vadd.f32 %v2207, %v2367
        %v2369 = vpop.f32.mrb[0].mxu0
        %v2370 = vpop.f32.mrb[0].mxu0
        %v2371 = vadd.f32 %v2210, %v2370
        %v2372 = vpop.f32.mrb[0].mxu0
        %2373 = vdwg.mxu0
        %v2374 = vadd.f32 %v2248, %v2251
        %v2375 = vadd.f32 %v2374, %v2256
        %v2376 = vadd.f32 %v2375, %v2259
        %v2377 = vadd.f32 %v2376, %v2264
        %v2378 = vadd.f32 %v2377, %v2267
        %v2379 = vadd.f32 %v2378, %v2272
        %v2380 = vadd.f32 %v2379, %v2275
        %v2381 = vadd.f32 %v2380, %v2280
        %v2382 = vadd.f32 %v2381, %v2283
        %v2383 = vadd.f32 %v2382, %v2288
        %v2384 = vadd.f32 %v2383, %v2291
        %v2385 = vadd.f32 %v2384, %v2296
        %v2386 = vadd.f32 %v2385, %v2299
        %v2387 = vadd.f32 %v2386, %v2304
        %v2388 = vadd.f32 %v2387, %v2307
        %v2389 = vadd.f32 %v2388, %v2312
        %v2390 = vadd.f32 %v2389, %v2315
        %v2391 = vadd.f32 %v2390, %v2320
        %v2392 = vadd.f32 %v2391, %v2323
        %v2393 = vadd.f32 %v2392, %v2328
        %v2394 = vadd.f32 %v2393, %v2331
        %v2395 = vadd.f32 %v2394, %v2336
        %v2396 = vadd.f32 %v2395, %v2339
        %v2397 = vadd.f32 %v2396, %v2344
        %v2398 = vadd.f32 %v2397, %v2347
        %v2399 = vadd.f32 %v2398, %v2352
        %v2400 = vadd.f32 %v2399, %v2355
        %v2401 = vadd.f32 %v2400, %v2360
        %v2402 = vadd.f32 %v2401, %v2363
        %v2403 = vadd.f32 %v2402, %v2368
        %v2404 = vadd.f32 %v2403, %v2371
        %v2405 = vrot.slane %v2404, 4
        %v2406 = vadd.f32 %v2404, %v2405
        %v2407 = vrot.slane %v2406, 2
        %v2408 = vadd.f32 %v2406, %v2407
        %v2409 = vrot.slane %v2408, 1
        %v2410 = vadd.f32 %v2408, %v2409
        %v2411 = vmul.f32 %v2248, %v2248
        %v2412 = vmul.f32 %v2251, %v2251
        %v2413 = vmul.f32 %v2256, %v2256
        %v2414 = vmul.f32 %v2259, %v2259
        %v2415 = vmul.f32 %v2264, %v2264
        %v2416 = vmul.f32 %v2267, %v2267
        %v2417 = vmul.f32 %v2272, %v2272
        %v2418 = vmul.f32 %v2275, %v2275
        %v2419 = vmul.f32 %v2280, %v2280
        %v2420 = vmul.f32 %v2283, %v2283
        %v2421 = vmul.f32 %v2288, %v2288
        %v2422 = vmul.f32 %v2291, %v2291
        %v2423 = vmul.f32 %v2296, %v2296
        %v2424 = vmul.f32 %v2299, %v2299
        %v2425 = vmul.f32 %v2304, %v2304
        %v2426 = vmul.f32 %v2307, %v2307
        %v2427 = vmul.f32 %v2312, %v2312
        %v2428 = vmul.f32 %v2315, %v2315
        %v2429 = vmul.f32 %v2320, %v2320
        %v2430 = vmul.f32 %v2323, %v2323
        %v2431 = vmul.f32 %v2328, %v2328
        %v2432 = vmul.f32 %v2331, %v2331
        %v2433 = vmul.f32 %v2336, %v2336
        %v2434 = vmul.f32 %v2339, %v2339
        %v2435 = vmul.f32 %v2344, %v2344
        %v2436 = vmul.f32 %v2347, %v2347
        %v2437 = vmul.f32 %v2352, %v2352
        %v2438 = vmul.f32 %v2355, %v2355
        %v2439 = vmul.f32 %v2360, %v2360
        %v2440 = vmul.f32 %v2363, %v2363
        %v2441 = vmul.f32 %v2368, %v2368
        %v2442 = vmul.f32 %v2371, %v2371
        %v2443 = vadd.f32 %v2411, %v2412
        %v2444 = vadd.f32 %v2443, %v2413
        %v2445 = vadd.f32 %v2444, %v2414
        %v2446 = vadd.f32 %v2445, %v2415
        %v2447 = vadd.f32 %v2446, %v2416
        %v2448 = vadd.f32 %v2447, %v2417
        %v2449 = vadd.f32 %v2448, %v2418
        %v2450 = vadd.f32 %v2449, %v2419
        %v2451 = vadd.f32 %v2450, %v2420
        %v2452 = vadd.f32 %v2451, %v2421
        %v2453 = vadd.f32 %v2452, %v2422
        %v2454 = vadd.f32 %v2453, %v2423
        %v2455 = vadd.f32 %v2454, %v2424
        %v2456 = vadd.f32 %v2455, %v2425
        %v2457 = vadd.f32 %v2456, %v2426
        %v2458 = vadd.f32 %v2457, %v2427
        %v2459 = vadd.f32 %v2458, %v2428
        %v2460 = vadd.f32 %v2459, %v2429
        %v2461 = vadd.f32 %v2460, %v2430
        %v2462 = vadd.f32 %v2461, %v2431
        %v2463 = vadd.f32 %v2462, %v2432
        %v2464 = vadd.f32 %v2463, %v2433
        %v2465 = vadd.f32 %v2464, %v2434
        %v2466 = vadd.f32 %v2465, %v2435
        %v2467 = vadd.f32 %v2466, %v2436
        %v2468 = vadd.f32 %v2467, %v2437
        %v2469 = vadd.f32 %v2468, %v2438
        %v2470 = vadd.f32 %v2469, %v2439
        %v2471 = vadd.f32 %v2470, %v2440
        %v2472 = vadd.f32 %v2471, %v2441
        %v2473 = vadd.f32 %v2472, %v2442
        %v2474 = vrot.slane %v2473, 4
        %v2475 = vadd.f32 %v2473, %v2474
        %v2476 = vrot.slane %v2475, 2
        %v2477 = vadd.f32 %v2475, %v2476
        %v2478 = vrot.slane %v2477, 1
        %v2479 = vadd.f32 %v2477, %v2478
        %vm2480 = vcmask 1040384
        %v2481 = vsel %vm2480, %v2410, %v2479
        %2482 = vst [vmem:[%s228] sm:$0x3] %v2481
        %2483 = vst [vmem:[%s221] sm:$0xff] %v2248
        %2484 = vst [vmem:[%s221 + $0x8] sm:$0xff] %v2251
        %2485 = vst [vmem:[%s221 + $0x10] sm:$0xff] %v2256
        %2486 = vst [vmem:[%s221 + $0x18] sm:$0xff] %v2259
        %2487 = vst [vmem:[%s221 + $0x20] sm:$0xff] %v2264
        %2488 = vst [vmem:[%s221 + $0x28] sm:$0xff] %v2267
        %2489 = vst [vmem:[%s221 + $0x30] sm:$0xff] %v2272
        %2490 = vst [vmem:[%s221 + $0x38] sm:$0xff] %v2275
        %2491 = vst [vmem:[%s221 + $0x40] sm:$0xff] %v2280
        %2492 = vst [vmem:[%s221 + $0x48] sm:$0xff] %v2283
        %2493 = vst [vmem:[%s221 + $0x50] sm:$0xff] %v2288
        %2494 = vst [vmem:[%s221 + $0x58] sm:$0xff] %v2291
        %2495 = vst [vmem:[%s221 + $0x60] sm:$0xff] %v2296
        %2496 = vst [vmem:[%s221 + $0x68] sm:$0xff] %v2299
        %2497 = vst [vmem:[%s221 + $0x70] sm:$0xff] %v2304
        %2498 = vst [vmem:[%s221 + $0x78] sm:$0xff] %v2307
        %2499 = vst [vmem:[%s221 + $0x80] sm:$0xff] %v2312
        %2500 = vst [vmem:[%s221 + $0x88] sm:$0xff] %v2315
        %2501 = vst [vmem:[%s221 + $0x90] sm:$0xff] %v2320
        %2502 = vst [vmem:[%s221 + $0x98] sm:$0xff] %v2323
        %2503 = vst [vmem:[%s221 + $0xa0] sm:$0xff] %v2328
        %2504 = vst [vmem:[%s221 + $0xa8] sm:$0xff] %v2331
        %2505 = vst [vmem:[%s221 + $0xb0] sm:$0xff] %v2336
        %2506 = vst [vmem:[%s221 + $0xb8] sm:$0xff] %v2339
        %2507 = vst [vmem:[%s221 + $0xc0] sm:$0xff] %v2344
        %2508 = vst [vmem:[%s221 + $0xc8] sm:$0xff] %v2347
        %2509 = vst [vmem:[%s221 + $0xd0] sm:$0xff] %v2352
        %2510 = vst [vmem:[%s221 + $0xd8] sm:$0xff] %v2355
        %2511 = vst [vmem:[%s221 + $0xe0] sm:$0xff] %v2360
        %2512 = vst [vmem:[%s221 + $0xe8] sm:$0xff] %v2363
        %2513 = vst [vmem:[%s221 + $0xf0] sm:$0xff] %v2368
        %2514 = vst [vmem:[%s221 + $0xf8] sm:$0xff] %v2371
        %s2515 = sand.u32 %s120, 1
        %s2516 = scalar_lea.sflag [#allocation4], %s2515
        %s2517 = sand.u32 %s120, 1
        %s2518 = smul.addr %s2517, 256
        %s2519 = scalar_lea.vmem [#allocation3], %s2518
        %s2520 = sand.u32 %s146, 1
        %s2521 = scalar_lea.sflag [#allocation6], %s2520
        %s2522 = sand.u32 %s146, 1
        %s2523 = smul.addr %s2522, 2
        %s2524 = scalar_lea.vmem [#allocation5], %s2523
        // Predicated region
        $region37: #{tpu_custom_call.1} parent=35 // pred_check
          %p2525 = pneg %p130
        $region38: #{tpu_custom_call.1} parent=35 // pred_check_branch
          %2527 = sbr.rel (%p2525) target = $region40
        $region39: #{tpu_custom_call.1} parent=35 // pred_region
          %s2529 = ssub.s32 4096, 4096
          %2530 = vsyncadd %s2516, %s2529
          %s2531 = smul.addr %s23, 32
          %s2532 = smul.addr %s2531, 128
          %s2533 = scalar_lea.hbm %s4, %s2532
          %s2534 = sshll.u32 %s2519, 4
          %s2535 = int_to_ptr.vmem [resolvable:$true] %s2534
          %2540 = dma.vmem_to_hbm [thread:$0]  %s2535, 4096, %s2533, %s2516, 128, 128, 8
        $region40: #{tpu_custom_call.1} parent=35 // pred_fallthru
          _
        // Predicated region
        $region41: #{tpu_custom_call.1} parent=35 // pred_check
          %p2541 = pneg %p156
        $region42: #{tpu_custom_call.1} parent=35 // pred_check_branch
          %2543 = sbr.rel (%p2541) target = $region44
        $region43: #{tpu_custom_call.1} parent=35 // pred_region
          %s2545 = ssub.s32 32, 32
          %2546 = vsyncadd %s2521, %s2545
          %s2547 = smul.addr %s23, 32
          %s2548 = scalar_lea.hbm %s5, %s2547
          %s2550 = sshll.u32 %s2524, 4
          %s2551 = int_to_ptr.vmem [resolvable:$true] %s2550
          %2553 = dma.vmem_to_hbm [thread:$0]  %s2551, 32, %s2548, %s2521
        $region44: #{tpu_custom_call.1} parent=35 // pred_fallthru
          _
      $region36: #{tpu_custom_call.1} parent=5 // pred_fallthru
        _
      %p2554 = scmp.le.s32.totalorder 2, %s18
      // Predicated region
      $region45: #{tpu_custom_call.1} parent=5 // pred_check
        %p2555 = pneg %p2554
      $region46: #{tpu_custom_call.1} parent=5 // pred_check_branch
        %2557 = sbr.rel (%p2555) target = $region48
      $region47: #{tpu_custom_call.1} parent=5 // pred_region
        %s2558 = ssub.s32 %s18, 2
        // Predicated region
        $region49: #{tpu_custom_call.1} parent=47 // pred_check
          %p2559 = pneg %p136
        $region50: #{tpu_custom_call.1} parent=47 // pred_check_branch
          %2561 = sbr.rel (%p2559) target = $region52
        $region51: #{tpu_custom_call.1} parent=47 // pred_region
          %s2562 = sand.u32 %s121, 1
          %s2563 = scalar_lea.sflag [#allocation4], %s2562
          %s2564 = sand.u32 %s121, 1
          %s2565 = smul.addr %s2564, 256
          %s2566 = scalar_lea.vmem [#allocation3], %s2565
          %2567 = dma.done %s2563, 4096
        $region52: #{tpu_custom_call.1} parent=47 // pred_fallthru
          _
        // Predicated region
        $region53: #{tpu_custom_call.1} parent=47 // pred_check
          %p2568 = pneg %p162
        $region54: #{tpu_custom_call.1} parent=47 // pred_check_branch
          %2570 = sbr.rel (%p2568) target = $region56
        $region55: #{tpu_custom_call.1} parent=47 // pred_region
          %s2571 = sand.u32 %s147, 1
          %s2572 = scalar_lea.sflag [#allocation6], %s2571
          %s2573 = sand.u32 %s147, 1
          %s2574 = smul.addr %s2573, 2
          %s2575 = scalar_lea.vmem [#allocation5], %s2574
          %2576 = dma.done %s2572, 32
        $region56: #{tpu_custom_call.1} parent=47 // pred_fallthru
          _
      $region48: #{tpu_custom_call.1} parent=5 // pred_fallthru
        _
    $region6: #{tpu_custom_call.1} parent=1 // loop_footer
      %s22 = sadd.s32 1, %s18
    $region7: #{tpu_custom_call.1} parent=1 // loop_footer_branch
      %17 = sbr.rel target = $region3
    $region8: #{tpu_custom_call.1} parent=1 // loop_exit
      _
    %2577 = vsyncpa [#allocation4], 1
    %s2578 = scalar_lea.sflag [#allocation4], 1
    %2579 = vsyncpa %s2578, 1
    %2580 = vsyncpa [#allocation6], 1
    %s2581 = scalar_lea.sflag [#allocation6], 1
    %2582 = vsyncpa %s2581, 1

</llo_original>
